<compile_context>
chip_gen: v7x
topology: tpu7x:2x2x1
jax: 0.10.0
libtpu: 0.0.40
codegen_flags: <defaults>
</compile_context>

<pallas_src>
import functools

import numpy as np

import jax
import jax.numpy as jnp
from jax.experimental import pallas as pl
from jax.experimental.pallas import tpu as pltpu


HG_DEPTH = 3                      # HourglassModule(64, 64, 3)
_VMEM_LIMIT = 32 * 1024 * 1024    # safe scoped-VMEM budget on v5e / v6e / v7x


# ----------------------------------------------------------------------------
# Pallas kernel: fused SAME-3x3 conv (+ optional extra 3x3 / 1x1 channel-split
# terms) + bias + activation + zero-border mask + optional residual add.
#
# Activation operands arrive in the padded-flat layout (1, S, C), S=(H+2)*(W+2).
# Tap (dy, dx) of the 3x3 window is the row slice at offset (dy-1)*(W+2)+(dx-1).
# Only the central S - 2*(W+3) rows can be valid pixels, so the matmuls run on
# that span; the first/last W+3 output rows are all padding and stored as zeros,
# and the left/right padding columns are zeroed with a per-row mask so the next
# conv sees true zero padding.
# ----------------------------------------------------------------------------
def _conv_kernel(*refs, n3, n1, W, act, has_add):
    x3 = refs[0:n3]
    w3 = refs[n3:2 * n3]
    x1 = refs[2 * n3:2 * n3 + n1]
    w1 = refs[2 * n3 + n1:2 * n3 + 2 * n1]
    b_ref = refs[2 * (n3 + n1)]
    mask_ref = refs[2 * (n3 + n1) + 1]
    add_ref = refs[2 * (n3 + n1) + 2] if has_add else None
    o_ref = refs[-1]

    S, Cout = o_ref.shape[1], o_ref.shape[2]
    m = W + 3                     # first/last m rows are all padding positions
    Rc = S - 2 * m                # central rows actually computed

    acc = jnp.zeros((Rc, Cout), jnp.float32)
    # 3x3 terms: nine accumulated MXU dots per operand (all operands in VMEM).
    for xr, wr in zip(x3, w3):
        for t in range(9):
            dy, dx = t // 3, t % 3
            off = (dy - 1) * (W + 2) + (dx - 1)
            lhs = xr[0, pl.ds(m + off, Rc), :]
            acc += jnp.dot(lhs, wr[t], preferred_element_type=jnp.float32)
    # 1x1 terms (channel-split projection skip / implicit-concat parts).
    for xr, wr in zip(x1, w1):
        acc += jnp.dot(xr[0, pl.ds(m, Rc), :], wr[...],
                       preferred_element_type=jnp.float32)

    acc += b_ref[...]                                   # (1, Cout) broadcast
    if act == "relu":
        acc = jnp.maximum(acc, 0.0)
    elif act == "sigmoid":
        acc = jax.nn.sigmoid(acc)
    # zero the left/right padding columns (keeps SAME zero padding for consumers)
    acc = acc * mask_ref[pl.ds(m, Rc), :]
    if has_add:                   # fused hourglass merge: relu(up1) + upsample(low)
        acc = acc + add_ref[0, pl.ds(m, Rc), :].astype(jnp.float32)

    dt = o_ref.dtype
    o_ref[0, pl.ds(0, m), :] = jnp.zeros((m, Cout), dt)
    o_ref[0, pl.ds(S - m, m), :] = jnp.zeros((m, Cout), dt)
    o_ref[0, pl.ds(m, Rc), :] = acc.astype(dt)


def _border_mask(H, W):
    """(S, 1) f32: 1.0 on interior pixels, 0.0 on the padding border."""
    msk = np.zeros((H + 2, W + 2, 1), np.float32)
    msk[1:H + 1, 1:W + 1, :] = 1.0
    return jnp.asarray(msk.reshape((H + 2) * (W + 2), 1))


def conv_block(x3, w3, x1, w1, bias, *, H, W, act="none", add=None,
               out_dtype=jnp.bfloat16):
    """One fused conv layer over padded-flat operands.

    x3 / w3 : lists of 3x3 operands (N, S, Ci) bf16 and weights (9, Ci, Cout) bf16
    x1 / w1 : lists of 1x1 operands (N, S, Ci) bf16 and weights (Ci, Cout) bf16
    bias    : (1, Cout) f32 (already fused where layers are fused)
    add     : optional (N, S, Cout) tensor added after the activation
    """
    N, S, _ = x3[0].shape
    Cout = bias.shape[1]
    n3, n1 = len(x3), len(x1)

    operands, in_specs = [], []
    for xa in x3:
        operands.append(xa)
        in_specs.append(pl.BlockSpec((1, S, xa.shape[2]), lambda n: (n, 0, 0)))
    for wa in w3:
        operands.append(wa)
        in_specs.append(pl.BlockSpec(wa.shape, lambda n: (0, 0, 0)))
    for xa in x1:
        operands.append(xa)
        in_specs.append(pl.BlockSpec((1, S, xa.shape[2]), lambda n: (n, 0, 0)))
    for wa in w1:
        operands.append(wa)
        in_specs.append(pl.BlockSpec(wa.shape, lambda n: (0, 0)))
    operands.append(bias)
    in_specs.append(pl.BlockSpec(bias.shape, lambda n: (0, 0)))
    operands.append(_border_mask(H, W))
    in_specs.append(pl.BlockSpec((S, 1), lambda n: (0, 0)))
    if add is not None:
        operands.append(add)
        in_specs.append(pl.BlockSpec((1, S, Cout), lambda n: (n, 0, 0)))

    kernel = functools.partial(_conv_kernel, n3=n3, n1=n1, W=W, act=act,
                               has_add=add is not None)
    return pl.pallas_call(
        kernel,
        out_shape=jax.ShapeDtypeStruct((N, S, Cout), out_dtype),
        grid=(N,),
        in_specs=in_specs,
        out_specs=pl.BlockSpec((1, S, Cout), lambda n: (n, 0, 0)),
        compiler_params=pltpu.CompilerParams(
            dimension_semantics=("parallel",),
            vmem_limit_bytes=_VMEM_LIMIT),
    )(*operands)


# ----------------------------------------------------------------------------
# Layout helpers (cheap XLA ops on small / quarter-size tensors).
# ----------------------------------------------------------------------------
def dense_to_flat(x):
    """(N,H,W,C) -> (N,(H+2)*(W+2),C) zero-padded flat layout."""
    N, H, W, C = x.shape
    xp = jnp.pad(x, ((0, 0), (1, 1), (1, 1), (0, 0)))
    return xp.reshape(N, (H + 2) * (W + 2), C)


def flat_to_dense(xf, H, W):
    N, _, C = xf.shape
    return xf.reshape(N, H + 2, W + 2, C)[:, 1:H + 1, 1:W + 1, :]


def maxpool_flat(xf, H, W):
    x = flat_to_dense(xf, H, W)
    N, _, _, C = x.shape
    x = jnp.max(x.reshape(N, H // 2, 2, W // 2, 2, C), axis=(2, 4))
    return dense_to_flat(x)


def upsample_flat(lowf, h, w):
    """x2 nearest-neighbour upsample, returned in padded-flat layout."""
    x = flat_to_dense(lowf, h, w)
    N, _, _, C = x.shape
    x = jnp.broadcast_to(x[:, :, None, :, None, :], (N, h, 2, w, 2, C))
    return dense_to_flat(x.reshape(N, 2 * h, 2 * w, C))


def image_to_flat(x_nchw):
    x = jnp.transpose(x_nchw, (0, 2, 3, 1))                 # NCHW -> NHWC
    pad_c = (-x.shape[-1]) % 8                               # RGB -> 8 channels
    if pad_c:
        x = jnp.pad(x, ((0, 0), (0, 0), (0, 0), (0, pad_c)))
    return dense_to_flat(x).astype(jnp.bfloat16)


# ----------------------------------------------------------------------------
# Raw parameter init (deterministic, He-style).
# ----------------------------------------------------------------------------
def conv_params(key, kh, kw, cin, cout):
    kw_, kb_ = jax.random.split(key)
    fan_in = kh * kw * cin
    w = jax.random.normal(kw_, (kh, kw, cin, cout), jnp.float32) * (2.0 / fan_in) ** 0.5
    b = jax.random.normal(kb_, (cout,), jnp.float32) * 0.01
    return {"w": w, "b": b}


# TODO(synk): ResBlock body not provided; using conv3x3(relu) -> conv3x3 plus a
# 1x1 projection skip, summed (the caller-side torch.relu is fused in-kernel).
def resblock_init(key, cin, cout):
    k1, k2, k3 = jax.random.split(key, 3)
    return {"c1": conv_params(k1, 3, 3, cin, cout),
            "c2": conv_params(k2, 3, 3, cout, cout),
            "skip": conv_params(k3, 1, 1, cin, cout)}


# TODO(synk): HourglassModule body not provided; canonical recursive U structure:
# skip conv branch + (pool -> conv -> recurse -> conv -> upsample), branches summed.
def hourglass_init(key, c, depth):
    k1, k2, k3, k4 = jax.random.split(key, 4)
    p = {"up1": conv_params(k1, 3, 3, c, c),
         "low1": conv_params(k2, 3, 3, c, c),
         "low3": conv_params(k4, 3, 3, c, c)}
    p["low2"] = hourglass_init(k3, c, depth - 1) if depth > 1 else conv_params(k3, 3, 3, c, c)
    return p


# TODO(synk): VGGHead body not provided; 4 conv3x3(relu) + 2 maxpools -> 64ch @ 1/4 res.
def vgg_init(key):
    k1, k2, k3, k4 = jax.random.split(key, 4)
    return {"c1": conv_params(k1, 3, 3, 3, 32),
            "c2": conv_params(k2, 3, 3, 32, 32),
            "c3": conv_params(k3, 3, 3, 32, 64),
            "c4": conv_params(k4, 3, 3, 64, 64)}


def hourglass_v1_init(key, n_pafs, n_keypoints, stages):
    keys = jax.random.split(key, 2 + 6 * stages)
    it = iter(keys)
    return {
        "vgg": vgg_init(next(it)),
        "class_ins": resblock_init(next(it), 128, 64),
        "paf_preps": [resblock_init(next(it), 128, 64) for _ in range(stages)],
        "pafs": [hourglass_init(next(it), 64, HG_DEPTH) for _ in range(stages)],
        "paf_outs": [conv_params(next(it), 3, 3, 64, n_pafs * 2) for _ in range(stages)],
        "class_preps": [resblock_init(next(it), 128, 64) for _ in range(stages)],
        "classes": [hourglass_init(next(it), 64, HG_DEPTH) for _ in range(stages)],
        "class_outs": [conv_params(next(it), 3, 3, 64, n_keypoints) for _ in range(stages)],
    }


# ----------------------------------------------------------------------------
# One-time parameter preparation: (9, Cin, Cout) bf16 tap weights, f32 biases,
# channel-split weights for the implicit concats, lane-padded head convs.
# ----------------------------------------------------------------------------
def _prep_conv3(p, lane_pad=False, cin_pad_to=None):
    w, b = p["w"], p["b"]
    kh, kw, cin, cout = w.shape
    if cin_pad_to is not None and cin_pad_to > cin:
        w = jnp.pad(w, ((0, 0), (0, 0), (0, cin_pad_to - cin), (0, 0)))
        cin = cin_pad_to
    if lane_pad:
        padc = (-cout) % 128
        if padc:
            w = jnp.pad(w, ((0, 0), (0, 0), (0, 0), (0, padc)))
            b = jnp.pad(b, (0, padc))
    return {"w": w.reshape(kh * kw, cin, -1).astype(jnp.bfloat16),
            "b": b.reshape(1, -1).astype(jnp.float32)}


def _prep_resblock(p, split=(64, 64)):
    """Split the 128-in-channel c1 / skip weights per implicit-concat part (so
    torch.cat is never materialized) and fuse the conv2 + skip biases."""
    w1 = p["c1"]["w"]                        # (3, 3, sum(split), cout)
    ws = p["skip"]["w"][0, 0]                # (sum(split), cout)
    cout = w1.shape[-1]
    c1_w, skip_w, off = [], [], 0
    for c in split:
        c1_w.append(w1[:, :, off:off + c, :].reshape(9, c, cout).astype(jnp.bfloat16))
        skip_w.append(ws[off:off + c, :].astype(jnp.bfloat16))
        off += c
    cm = p["c2"]["w"].shape[2]
    return {"c1_w": c1_w,
            "c1_b": p["c1"]["b"].reshape(1, -1).astype(jnp.float32),
            "c2_w": p["c2"]["w"].reshape(9, cm, cout).astype(jnp.bfloat16),
            "skip_w": skip_w,
            "b2": (p["c2"]["b"] + p["skip"]["b"]).reshape(1, -1).astype(jnp.float32)}


def _prep_hourglass(p, depth):
    out = {"up1": _prep_conv3(p["up1"]),
           "low1": _prep_conv3(p["low1"]),
           "low3": _prep_conv3(p["low3"])}
    out["low2"] = (_prep_hourglass(p["low2"], depth - 1)
                   if depth > 1 else _prep_conv3(p["low2"]))
    return out


def prepare_params(raw):
    return {
        "vgg": {"c1": _prep_conv3(raw["vgg"]["c1"], cin_pad_to=8),  # RGB -> 8 ch
                "c2": _prep_conv3(raw["vgg"]["c2"]),
                "c3": _prep_conv3(raw["vgg"]["c3"]),
                "c4": _prep_conv3(raw["vgg"]["c4"])},
        "class_ins": _prep_resblock(raw["class_ins"]),
        "paf_preps": [_prep_resblock(p) for p in raw["paf_preps"]],
        "pafs": [_prep_hourglass(p, HG_DEPTH) for p in raw["pafs"]],
        "paf_outs": [_prep_conv3(p, lane_pad=True) for p in raw["paf_outs"]],
        "class_preps": [_prep_resblock(p) for p in raw["class_preps"]],
        "classes": [_prep_hourglass(p, HG_DEPTH) for p in raw["classes"]],
        "class_outs": [_prep_conv3(p, lane_pad=True) for p in raw["class_outs"]],
    }


# ----------------------------------------------------------------------------
# Sub-module forward passes (all activations in padded-flat layout, bf16).
# ----------------------------------------------------------------------------
def resblock_apply(pp, parts, H, W):
    """ResBlock over the implicit channel-concat of `parts` (never materialized);
    the second kernel fuses conv2 + 1x1 skip + bias + the caller-side relu."""
    h = conv_block(parts, pp["c1_w"], [], [], pp["c1_b"], H=H, W=W, act="relu")
    return conv_block([h], [pp["c2_w"]], parts, pp["skip_w"], pp["b2"],
                      H=H, W=W, act="relu")


def hourglass_apply(pp, xf, H, W, depth):
    h, w = H // 2, W // 2
    low = maxpool_flat(xf, H, W)
    low = conv_block([low], [pp["low1"]["w"]], [], [], pp["low1"]["b"],
                     H=h, W=w, act="relu")
    if depth > 1:
        low = hourglass_apply(pp["low2"], low, h, w, depth - 1)
    else:
        low = conv_block([low], [pp["low2"]["w"]], [], [], pp["low2"]["b"],
                         H=h, W=w, act="relu")
    low = conv_block([low], [pp["low3"]["w"]], [], [], pp["low3"]["b"],
                     H=h, W=w, act="relu")
    # low branch first, then up1 with the x2-upsampled low fused into its epilogue.
    return conv_block([xf], [pp["up1"]["w"]], [], [], pp["up1"]["b"],
                      H=H, W=W, act="relu", add=upsample_flat(low, h, w))


def vgg_apply(pp, xf, H, W):
    x = conv_block([xf], [pp["c1"]["w"]], [], [], pp["c1"]["b"], H=H, W=W, act="relu")
    x = conv_block([x], [pp["c2"]["w"]], [], [], pp["c2"]["b"], H=H, W=W, act="relu")
    x = maxpool_flat(x, H, W)
    H, W = H // 2, W // 2
    x = conv_block([x], [pp["c3"]["w"]], [], [], pp["c3"]["b"], H=H, W=W, act="relu")
    x = conv_block([x], [pp["c4"]["w"]], [], [], pp["c4"]["b"], H=H, W=W, act="relu")
    x = maxpool_flat(x, H, W)
    return x, H // 2, W // 2


def head_apply(pp, xf, H, W, act, n_valid):
    out = conv_block([xf], [pp["w"]], [], [], pp["b"], H=H, W=W, act=act,
                     out_dtype=jnp.float32)
    # slice the valid channels BEFORE the NHWC->NCHW transpose (perf review #5)
    d = flat_to_dense(out, H, W)[..., :n_valid]
    return jnp.transpose(d, (0, 3, 1, 2))


# ----------------------------------------------------------------------------
# HourglassV1 forward.
# ----------------------------------------------------------------------------
@functools.partial(jax.jit, static_argnums=(2, 3, 4))
def hourglass_v1_apply(params, x_nchw, stages, n_pafs, n_keypoints):
    H, W = x_nchw.shape[2], x_nchw.shape[3]
    xf = image_to_flat(x_nchw)
    vgg, H, W = vgg_apply(params["vgg"], xf, H, W)

    x = vgg
    pos = []
    for s in range(stages):
        x = hourglass_apply(params["pafs"][s], x, H, W, HG_DEPTH)
        pos.append(head_apply(params["paf_outs"][s], x, H, W, "none", n_pafs * 2))
        if s != stages - 1:
            # torch.cat((vgg, x), 1) stays implicit: both parts feed the kernels
            x = resblock_apply(params["paf_preps"][s], [vgg, x], H, W)

    class_input = resblock_apply(params["class_ins"], [vgg, x], H, W)
    x = class_input
    cos = []
    for s in range(stages):
        x = hourglass_apply(params["classes"][s], x, H, W, HG_DEPTH)
        cos.append(head_apply(params["class_outs"][s], x, H, W, "sigmoid",
                              n_keypoints))
        if s != stages - 1:
            x = resblock_apply(params["class_preps"][s], [class_input, x], H, W)
    return pos, cos


if __name__ == "__main__":
    key = jax.random.PRNGKey(0)
    k_params, k_x = jax.random.split(key)

    # quick numeric self-check of the fused conv kernel against lax.conv (bf16
    # operands, f32 accumulation on both sides).
    xs = jax.random.normal(jax.random.PRNGKey(1), (2, 8, 8, 64), jnp.float32)
    ps = conv_params(jax.random.PRNGKey(2), 3, 3, 64, 64)
    pp = _prep_conv3(ps)
    got = flat_to_dense(
        conv_block([dense_to_flat(xs.astype(jnp.bfloat16))], [pp["w"]], [], [],
                   pp["b"], H=8, W=8, act="relu"), 8, 8).astype(jnp.float32)
    ref = jax.lax.conv_general_dilated(
        xs.astype(jnp.bfloat16).astype(jnp.float32),
        ps["w"].astype(jnp.bfloat16).astype(jnp.float32),
        (1, 1), "SAME", dimension_numbers=("NHWC", "HWIO", "NHWC"))
    ref = jnp.maximum(ref + ps["b"], 0.0)
    assert float(jnp.max(jnp.abs(got - ref))) < 0.05

    # small shapes: batch=2, RGB 32x32 -> VGG head gives 64ch @ 8x8, which supports
    # a depth-3 hourglass (8 -> 4 -> 2 -> 1).
    N, C, H, W = 2, 3, 32, 32
    n_pafs, n_keypoints, stages = 3, 4, 2

    raw_params = hourglass_v1_init(k_params, n_pafs, n_keypoints, stages)
    params = prepare_params(raw_params)
    x = jax.random.normal(k_x, (N, C, H, W), jnp.float32)

    pos, cos = hourglass_v1_apply(params, x, stages, n_pafs, n_keypoints)
    jax.block_until_ready((pos, cos))

    assert len(pos) == stages and len(cos) == stages
    assert pos[0].shape == (N, n_pafs * 2, H // 4, W // 4)
    assert cos[0].shape == (N, n_keypoints, H // 4, W // 4)
    assert bool(jnp.all(jnp.isfinite(pos[0]))) and bool(jnp.all(jnp.isfinite(cos[0])))
    print("KERNEL_OK")
</pallas_src>

<mosaic_0001>
module attributes {stable_mosaic.version = 11 : i64} {
  func.func @_conv_kernel(%arg0: i32, %arg1: memref<1x100x64xbf16, #tpu.memory_space<vmem>>, %arg2: memref<9x64x64xbf16, #tpu.memory_space<vmem>>, %arg3: memref<1x64xf32, #tpu.memory_space<vmem>>, %arg4: memref<100x1xf32, #tpu.memory_space<vmem>>, %arg5: memref<1x100x64xbf16, #tpu.memory_space<vmem>>) attributes {dimension_semantics = [#tpu.dimension_semantics<parallel>], iteration_bounds = array<i64: 2>, scalar_prefetch = 0 : i64, scratch_operands = 0 : i64, tpu.core_type = #tpu.core_type<tc>, window_params = [{transform_indices = @transform_0, window_bounds = array<i64: 1, 100, 64>}, {pipeline_mode = #tpu.pipeline_mode<synchronous>, transform_indices = @transform_1, window_bounds = array<i64: 9, 64, 64>}, {pipeline_mode = #tpu.pipeline_mode<synchronous>, transform_indices = @transform_2, window_bounds = array<i64: 1, 64>}, {pipeline_mode = #tpu.pipeline_mode<synchronous>, transform_indices = @transform_3, window_bounds = array<i64: 100, 1>}, {transform_indices = @transform_4, window_bounds = array<i64: 1, 100, 64>}]} {
    %cst = arith.constant 0.000000e+00 : f32
    %0 = vector.broadcast %cst : f32 to vector<78x64xf32>
    %c0 = arith.constant 0 : index
    %c0_0 = arith.constant 0 : index
    %c0_1 = arith.constant 0 : index
    %1 = vector.load %arg1[%c0, %c0_0, %c0_1] : memref<1x100x64xbf16, #tpu.memory_space<vmem>>, vector<1x78x64xbf16>
    %2 = vector.shape_cast %1 : vector<1x78x64xbf16> to vector<78x64xbf16>
    %c0_2 = arith.constant 0 : index
    %c0_3 = arith.constant 0 : index
    %c0_4 = arith.constant 0 : index
    %3 = vector.load %arg2[%c0_2, %c0_3, %c0_4] : memref<9x64x64xbf16, #tpu.memory_space<vmem>>, vector<1x64x64xbf16>
    %4 = vector.shape_cast %3 : vector<1x64x64xbf16> to vector<64x64xbf16>
    %cst_5 = arith.constant dense<0.000000e+00> : vector<78x64xf32>
    %5 = tpu.matmul %2, %4, %cst_5 {dimension_numbers = #tpu.dot_dimension_numbers<[1], [0], [0], [1], [0, 0, 1, 1], [], []>} : vector<78x64xbf16>, vector<64x64xbf16>, vector<78x64xf32> -> vector<78x64xf32>
    %6 = arith.addf %0, %5 : vector<78x64xf32>
    %c0_6 = arith.constant 0 : index
    %c1 = arith.constant 1 : index
    %c0_7 = arith.constant 0 : index
    %7 = vector.load %arg1[%c0_6, %c1, %c0_7] : memref<1x100x64xbf16, #tpu.memory_space<vmem>>, vector<1x78x64xbf16>
    %8 = vector.shape_cast %7 : vector<1x78x64xbf16> to vector<78x64xbf16>
    %c1_8 = arith.constant 1 : index
    %c0_9 = arith.constant 0 : index
    %c0_10 = arith.constant 0 : index
    %9 = vector.load %arg2[%c1_8, %c0_9, %c0_10] : memref<9x64x64xbf16, #tpu.memory_space<vmem>>, vector<1x64x64xbf16>
    %10 = vector.shape_cast %9 : vector<1x64x64xbf16> to vector<64x64xbf16>
    %cst_11 = arith.constant dense<0.000000e+00> : vector<78x64xf32>
    %11 = tpu.matmul %8, %10, %cst_11 {dimension_numbers = #tpu.dot_dimension_numbers<[1], [0], [0], [1], [0, 0, 1, 1], [], []>} : vector<78x64xbf16>, vector<64x64xbf16>, vector<78x64xf32> -> vector<78x64xf32>
    %12 = arith.addf %6, %11 : vector<78x64xf32>
    %c0_12 = arith.constant 0 : index
    %c2 = arith.constant 2 : index
    %c0_13 = arith.constant 0 : index
    %13 = vector.load %arg1[%c0_12, %c2, %c0_13] : memref<1x100x64xbf16, #tpu.memory_space<vmem>>, vector<1x78x64xbf16>
    %14 = vector.shape_cast %13 : vector<1x78x64xbf16> to vector<78x64xbf16>
    %c2_14 = arith.constant 2 : index
    %c0_15 = arith.constant 0 : index
    %c0_16 = arith.constant 0 : index
    %15 = vector.load %arg2[%c2_14, %c0_15, %c0_16] : memref<9x64x64xbf16, #tpu.memory_space<vmem>>, vector<1x64x64xbf16>
    %16 = vector.shape_cast %15 : vector<1x64x64xbf16> to vector<64x64xbf16>
    %cst_17 = arith.constant dense<0.000000e+00> : vector<78x64xf32>
    %17 = tpu.matmul %14, %16, %cst_17 {dimension_numbers = #tpu.dot_dimension_numbers<[1], [0], [0], [1], [0, 0, 1, 1], [], []>} : vector<78x64xbf16>, vector<64x64xbf16>, vector<78x64xf32> -> vector<78x64xf32>
    %18 = arith.addf %12, %17 : vector<78x64xf32>
    %c0_18 = arith.constant 0 : index
    %c10 = arith.constant 10 : index
    %c0_19 = arith.constant 0 : index
    %19 = vector.load %arg1[%c0_18, %c10, %c0_19] : memref<1x100x64xbf16, #tpu.memory_space<vmem>>, vector<1x78x64xbf16>
    %20 = vector.shape_cast %19 : vector<1x78x64xbf16> to vector<78x64xbf16>
    %c3 = arith.constant 3 : index
    %c0_20 = arith.constant 0 : index
    %c0_21 = arith.constant 0 : index
    %21 = vector.load %arg2[%c3, %c0_20, %c0_21] : memref<9x64x64xbf16, #tpu.memory_space<vmem>>, vector<1x64x64xbf16>
    %22 = vector.shape_cast %21 : vector<1x64x64xbf16> to vector<64x64xbf16>
    %cst_22 = arith.constant dense<0.000000e+00> : vector<78x64xf32>
    %23 = tpu.matmul %20, %22, %cst_22 {dimension_numbers = #tpu.dot_dimension_numbers<[1], [0], [0], [1], [0, 0, 1, 1], [], []>} : vector<78x64xbf16>, vector<64x64xbf16>, vector<78x64xf32> -> vector<78x64xf32>
    %24 = arith.addf %18, %23 : vector<78x64xf32>
    %c0_23 = arith.constant 0 : index
    %c11 = arith.constant 11 : index
    %c0_24 = arith.constant 0 : index
    %25 = vector.load %arg1[%c0_23, %c11, %c0_24] : memref<1x100x64xbf16, #tpu.memory_space<vmem>>, vector<1x78x64xbf16>
    %26 = vector.shape_cast %25 : vector<1x78x64xbf16> to vector<78x64xbf16>
    %c4 = arith.constant 4 : index
    %c0_25 = arith.constant 0 : index
    %c0_26 = arith.constant 0 : index
    %27 = vector.load %arg2[%c4, %c0_25, %c0_26] : memref<9x64x64xbf16, #tpu.memory_space<vmem>>, vector<1x64x64xbf16>
    %28 = vector.shape_cast %27 : vector<1x64x64xbf16> to vector<64x64xbf16>
    %cst_27 = arith.constant dense<0.000000e+00> : vector<78x64xf32>
    %29 = tpu.matmul %26, %28, %cst_27 {dimension_numbers = #tpu.dot_dimension_numbers<[1], [0], [0], [1], [0, 0, 1, 1], [], []>} : vector<78x64xbf16>, vector<64x64xbf16>, vector<78x64xf32> -> vector<78x64xf32>
    %30 = arith.addf %24, %29 : vector<78x64xf32>
    %c0_28 = arith.constant 0 : index
    %c12 = arith.constant 12 : index
    %c0_29 = arith.constant 0 : index
    %31 = vector.load %arg1[%c0_28, %c12, %c0_29] : memref<1x100x64xbf16, #tpu.memory_space<vmem>>, vector<1x78x64xbf16>
    %32 = vector.shape_cast %31 : vector<1x78x64xbf16> to vector<78x64xbf16>
    %c5 = arith.constant 5 : index
    %c0_30 = arith.constant 0 : index
    %c0_31 = arith.constant 0 : index
    %33 = vector.load %arg2[%c5, %c0_30, %c0_31] : memref<9x64x64xbf16, #tpu.memory_space<vmem>>, vector<1x64x64xbf16>
    %34 = vector.shape_cast %33 : vector<1x64x64xbf16> to vector<64x64xbf16>
    %cst_32 = arith.constant dense<0.000000e+00> : vector<78x64xf32>
    %35 = tpu.matmul %32, %34, %cst_32 {dimension_numbers = #tpu.dot_dimension_numbers<[1], [0], [0], [1], [0, 0, 1, 1], [], []>} : vector<78x64xbf16>, vector<64x64xbf16>, vector<78x64xf32> -> vector<78x64xf32>
    %36 = arith.addf %30, %35 : vector<78x64xf32>
    %c0_33 = arith.constant 0 : index
    %c20 = arith.constant 20 : index
    %c0_34 = arith.constant 0 : index
    %37 = vector.load %arg1[%c0_33, %c20, %c0_34] : memref<1x100x64xbf16, #tpu.memory_space<vmem>>, vector<1x78x64xbf16>
    %38 = vector.shape_cast %37 : vector<1x78x64xbf16> to vector<78x64xbf16>
    %c6 = arith.constant 6 : index
    %c0_35 = arith.constant 0 : index
    %c0_36 = arith.constant 0 : index
    %39 = vector.load %arg2[%c6, %c0_35, %c0_36] : memref<9x64x64xbf16, #tpu.memory_space<vmem>>, vector<1x64x64xbf16>
    %40 = vector.shape_cast %39 : vector<1x64x64xbf16> to vector<64x64xbf16>
    %cst_37 = arith.constant dense<0.000000e+00> : vector<78x64xf32>
    %41 = tpu.matmul %38, %40, %cst_37 {dimension_numbers = #tpu.dot_dimension_numbers<[1], [0], [0], [1], [0, 0, 1, 1], [], []>} : vector<78x64xbf16>, vector<64x64xbf16>, vector<78x64xf32> -> vector<78x64xf32>
    %42 = arith.addf %36, %41 : vector<78x64xf32>
    %c0_38 = arith.constant 0 : index
    %c21 = arith.constant 21 : index
    %c0_39 = arith.constant 0 : index
    %43 = vector.load %arg1[%c0_38, %c21, %c0_39] : memref<1x100x64xbf16, #tpu.memory_space<vmem>>, vector<1x78x64xbf16>
    %44 = vector.shape_cast %43 : vector<1x78x64xbf16> to vector<78x64xbf16>
    %c7 = arith.constant 7 : index
    %c0_40 = arith.constant 0 : index
    %c0_41 = arith.constant 0 : index
    %45 = vector.load %arg2[%c7, %c0_40, %c0_41] : memref<9x64x64xbf16, #tpu.memory_space<vmem>>, vector<1x64x64xbf16>
    %46 = vector.shape_cast %45 : vector<1x64x64xbf16> to vector<64x64xbf16>
    %cst_42 = arith.constant dense<0.000000e+00> : vector<78x64xf32>
    %47 = tpu.matmul %44, %46, %cst_42 {dimension_numbers = #tpu.dot_dimension_numbers<[1], [0], [0], [1], [0, 0, 1, 1], [], []>} : vector<78x64xbf16>, vector<64x64xbf16>, vector<78x64xf32> -> vector<78x64xf32>
    %48 = arith.addf %42, %47 : vector<78x64xf32>
    %c0_43 = arith.constant 0 : index
    %c22 = arith.constant 22 : index
    %c0_44 = arith.constant 0 : index
    %49 = vector.load %arg1[%c0_43, %c22, %c0_44] : memref<1x100x64xbf16, #tpu.memory_space<vmem>>, vector<1x78x64xbf16>
    %50 = vector.shape_cast %49 : vector<1x78x64xbf16> to vector<78x64xbf16>
    %c8 = arith.constant 8 : index
    %c0_45 = arith.constant 0 : index
    %c0_46 = arith.constant 0 : index
    %51 = vector.load %arg2[%c8, %c0_45, %c0_46] : memref<9x64x64xbf16, #tpu.memory_space<vmem>>, vector<1x64x64xbf16>
    %52 = vector.shape_cast %51 : vector<1x64x64xbf16> to vector<64x64xbf16>
    %cst_47 = arith.constant dense<0.000000e+00> : vector<78x64xf32>
    %53 = tpu.matmul %50, %52, %cst_47 {dimension_numbers = #tpu.dot_dimension_numbers<[1], [0], [0], [1], [0, 0, 1, 1], [], []>} : vector<78x64xbf16>, vector<64x64xbf16>, vector<78x64xf32> -> vector<78x64xf32>
    %54 = arith.addf %48, %53 : vector<78x64xf32>
    %c0_48 = arith.constant 0 : index
    %c0_49 = arith.constant 0 : index
    %55 = vector.load %arg3[%c0_48, %c0_49] : memref<1x64xf32, #tpu.memory_space<vmem>>, vector<1x64xf32>
    %56 = vector.broadcast %55 : vector<1x64xf32> to vector<78x64xf32>
    %57 = arith.addf %54, %56 : vector<78x64xf32>
    %cst_50 = arith.constant 0.000000e+00 : f32
    %58 = vector.broadcast %cst_50 : f32 to vector<78x64xf32>
    %59 = arith.maximumf %57, %58 : vector<78x64xf32>
    %c11_51 = arith.constant 11 : index
    %c0_52 = arith.constant 0 : index
    %60 = vector.load %arg4[%c11_51, %c0_52] : memref<100x1xf32, #tpu.memory_space<vmem>>, vector<78x1xf32>
    %61 = vector.broadcast %60 : vector<78x1xf32> to vector<78x64xf32>
    %62 = arith.mulf %59, %61 : vector<78x64xf32>
    %cst_53 = arith.constant 0.000000e+00 : bf16
    %63 = vector.broadcast %cst_53 : bf16 to vector<11x64xbf16>
    %c0_54 = arith.constant 0 : index
    %c0_55 = arith.constant 0 : index
    %c0_56 = arith.constant 0 : index
    %64 = vector.load %arg5[%c0_54, %c0_55, %c0_56] : memref<1x100x64xbf16, #tpu.memory_space<vmem>>, vector<1x11x64xbf16>
    %65 = vector.shape_cast %64 : vector<1x11x64xbf16> to vector<11x64xbf16>
    %66 = vector.shape_cast %63 : vector<11x64xbf16> to vector<1x11x64xbf16>
    tpu.vector_store %arg5[%c0_54, %c0_55, %c0_56], %66 {strides = array<i32>} : memref<1x100x64xbf16, #tpu.memory_space<vmem>>, vector<1x11x64xbf16>,
    %cst_57 = arith.constant 0.000000e+00 : bf16
    %67 = vector.broadcast %cst_57 : bf16 to vector<11x64xbf16>
    %c0_58 = arith.constant 0 : index
    %c89 = arith.constant 89 : index
    %c0_59 = arith.constant 0 : index
    %68 = vector.load %arg5[%c0_58, %c89, %c0_59] : memref<1x100x64xbf16, #tpu.memory_space<vmem>>, vector<1x11x64xbf16>
    %69 = vector.shape_cast %68 : vector<1x11x64xbf16> to vector<11x64xbf16>
    %70 = vector.shape_cast %67 : vector<11x64xbf16> to vector<1x11x64xbf16>
    tpu.vector_store %arg5[%c0_58, %c89, %c0_59], %70 {strides = array<i32>} : memref<1x100x64xbf16, #tpu.memory_space<vmem>>, vector<1x11x64xbf16>,
    %71 = arith.truncf %62 : vector<78x64xf32> to vector<78x64xbf16>
    %c0_60 = arith.constant 0 : index
    %c11_61 = arith.constant 11 : index
    %c0_62 = arith.constant 0 : index
    %72 = vector.load %arg5[%c0_60, %c11_61, %c0_62] : memref<1x100x64xbf16, #tpu.memory_space<vmem>>, vector<1x78x64xbf16>
    %73 = vector.shape_cast %72 : vector<1x78x64xbf16> to vector<78x64xbf16>
    %74 = vector.shape_cast %71 : vector<78x64xbf16> to vector<1x78x64xbf16>
    tpu.vector_store %arg5[%c0_60, %c11_61, %c0_62], %74 {strides = array<i32>} : memref<1x100x64xbf16, #tpu.memory_space<vmem>>, vector<1x78x64xbf16>,
    return
  }
  func.func @transform_0(%arg0: i32) -> (i32, i32, i32) {
    %c0_i32 = arith.constant 0 : i32
    %c0_i32_0 = arith.constant 0 : i32
    %c0_i32_1 = arith.constant 0 : i32
    return %arg0, %c0_i32, %c0_i32_0 : i32, i32, i32
  }
  func.func @transform_1(%arg0: i32) -> (i32, i32, i32) {
    %c0_i32 = arith.constant 0 : i32
    %c0_i32_0 = arith.constant 0 : i32
    %c0_i32_1 = arith.constant 0 : i32
    %c0_i32_2 = arith.constant 0 : i32
    return %c0_i32, %c0_i32_0, %c0_i32_1 : i32, i32, i32
  }
  func.func @transform_2(%arg0: i32) -> (i32, i32) {
    %c0_i32 = arith.constant 0 : i32
    %c0_i32_0 = arith.constant 0 : i32
    %c0_i32_1 = arith.constant 0 : i32
    return %c0_i32, %c0_i32_0 : i32, i32
  }
  func.func @transform_3(%arg0: i32) -> (i32, i32) {
    %c0_i32 = arith.constant 0 : i32
    %c0_i32_0 = arith.constant 0 : i32
    %c0_i32_1 = arith.constant 0 : i32
    return %c0_i32, %c0_i32_0 : i32, i32
  }
  func.func @transform_4(%arg0: i32) -> (i32, i32, i32) {
    %c0_i32 = arith.constant 0 : i32
    %c0_i32_0 = arith.constant 0 : i32
    %c0_i32_1 = arith.constant 0 : i32
    return %arg0, %c0_i32, %c0_i32_0 : i32, i32, i32
  }
}

</mosaic_0001>

<llo_original>
// kernel: tpu_custom_call.1
$region0: #{tpu_custom_call.1}
  #allocation0 [shape = 'u32[]', space=smem, size = 0x4, offset = 0x4, fixed_abs, tag = 'smem constant byte address 0x4 - core index']
  #allocation1 [shape = 'u32[144,128]{1,0:T(1,128)}', space=vmem, size = 0x12000, scoped, tag = 'internal scratch']
  %s0 = inlined_call_operand.vmem [shape: bf16[2,100,64], index: 0, kind: input, shape index: {}]
  %s1 = inlined_call_operand.hbm [shape: bf16[9,64,64], index: 1, kind: input, shape index: {}]
  %s2 = inlined_call_operand.vmem [shape: f32[1,64], index: 2, kind: input, shape index: {}]
  %s3 = inlined_call_operand.vmem [shape: f32[100,1], index: 3, kind: input, shape index: {}]
  %s4 = inlined_call_operand.vmem [shape: bf16[2,100,64], index: 4, kind: output, shape index: {}]
  %s5 = sld [smem:[#allocation0]]
  $region53: #{tpu_custom_call.1} parent=0
    _
  %s7 = ssub.s32 1, %s5
  %s8 = scalar_select 0, %s7, %s5
  $region1: #{tpu_custom_call.1} parent=0
    #allocation2 [shape = 'u8[147456]{0}', space=vmem, size = 0x24000, scoped, tag = 'input window, operand 1, single buffered']
    #allocation3 [shape = 's32[2]{0}', space=sflag, size = 0x8, scoped, tag = 'scoped memory for tpu_custom_call.1']
    %9 = vsyncpa [#allocation3], 0
    loop: start=0, step=1, limit=4
    $region2: #{tpu_custom_call.1} parent=1 // loop_pre_header
      _
    $region3: #{tpu_custom_call.1} parent=1 // loop_header
      %s11 = sphi 0, %s15
      %p12 = scmp.ge.s32.totalorder %s11, 4
      %s21 = sphi 0, %s23
      %s24 = sphi 0, %s21
      %s25 = sphi 0, %s24
      %s41 = sphi 0, %s25
      %s45 = sphi 0, %s45
      %s47 = sphi 0, %s45
      %s48 = sphi 0, %s47
      %s62 = sphi 0, %s48
      %s66 = sphi 0, %s66
      %s68 = sphi 0, %s66
      %s69 = sphi 0, %s68
      %s83 = sphi 0, %s69
      %s87 = sphi 0, %s87
      %s89 = sphi 0, %s87
      %s90 = sphi 0, %s89
      %s104 = sphi 0, %s90
      %s110 = sphi 0, %s112
      %s113 = sphi 0, %s110
      %s114 = sphi 0, %s113
      %s130 = sphi 0, %s114
    $region4: #{tpu_custom_call.1} parent=1 // loop_header_branch
      %14 = sbr.rel (%p12) target = $region8
    $region5: #{tpu_custom_call.1} parent=1 // loop_body
      %s16 = ssub.s32 %s11, 1
      %s17 = ssub.s32 %s11, 2
      %s18 = sadd.s32 %s11, 1
      %s19 = ssub.s32 %s11, %s18
      %p20 = scmp.eq.s32.totalorder %s19, 0
      %s22 = sadd.s32 %s21, 1
      %s23 = scalar_select %p20, %s21, %s22
      %p26 = pneg %p20
      %p27 = scmp.eq.s32.totalorder %s11, 1
      %p28 = por %p26, %p27
      %p29 = scmp.ne.s32.totalorder %s21, %s24
      %p30 = scmp.eq.s32.totalorder %s11, 0
      %p31 = por %p29, %p30
      %p32 = scmp.ne.s32.totalorder %s21, %s24
      %p33 = scmp.eq.s32.totalorder %s16, 1
      %p34 = por %p32, %p33
      %p35 = scmp.ne.s32.totalorder %s24, %s25
      %p36 = scmp.eq.s32.totalorder %s16, 0
      %p37 = por %p35, %p36
      %p38 = scmp.ne.s32.totalorder %s24, %s25
      %p39 = scmp.eq.s32.totalorder %s17, 1
      %p40 = por %p38, %p39
      %p42 = scmp.ne.s32.totalorder %s25, %s41
      %p43 = scmp.eq.s32.totalorder %s17, 0
      %p44 = por %p42, %p43
      %s46 = sadd.s32 %s45, 1
      %p49 = scmp.eq.s32.totalorder %s11, 1
      %p50 = scmp.ne.s32.totalorder %s45, %s47
      %p51 = scmp.eq.s32.totalorder %s11, 0
      %p52 = por %p50, %p51
      %p53 = scmp.ne.s32.totalorder %s45, %s47
      %p54 = scmp.eq.s32.totalorder %s16, 1
      %p55 = por %p53, %p54
      %p56 = scmp.ne.s32.totalorder %s47, %s48
      %p57 = scmp.eq.s32.totalorder %s16, 0
      %p58 = por %p56, %p57
      %p59 = scmp.ne.s32.totalorder %s47, %s48
      %p60 = scmp.eq.s32.totalorder %s17, 1
      %p61 = por %p59, %p60
      %p63 = scmp.ne.s32.totalorder %s48, %s62
      %p64 = scmp.eq.s32.totalorder %s17, 0
      %p65 = por %p63, %p64
      %s67 = sadd.s32 %s66, 1
      %p70 = scmp.eq.s32.totalorder %s11, 1
      %p71 = scmp.ne.s32.totalorder %s66, %s68
      %p72 = scmp.eq.s32.totalorder %s11, 0
      %p73 = por %p71, %p72
      %p74 = scmp.ne.s32.totalorder %s66, %s68
      %p75 = scmp.eq.s32.totalorder %s16, 1
      %p76 = por %p74, %p75
      %p77 = scmp.ne.s32.totalorder %s68, %s69
      %p78 = scmp.eq.s32.totalorder %s16, 0
      %p79 = por %p77, %p78
      %p80 = scmp.ne.s32.totalorder %s68, %s69
      %p81 = scmp.eq.s32.totalorder %s17, 1
      %p82 = por %p80, %p81
      %p84 = scmp.ne.s32.totalorder %s69, %s83
      %p85 = scmp.eq.s32.totalorder %s17, 0
      %p86 = por %p84, %p85
      %s88 = sadd.s32 %s87, 1
      %p91 = scmp.eq.s32.totalorder %s11, 1
      %p92 = scmp.ne.s32.totalorder %s87, %s89
      %p93 = scmp.eq.s32.totalorder %s11, 0
      %p94 = por %p92, %p93
      %p95 = scmp.ne.s32.totalorder %s87, %s89
      %p96 = scmp.eq.s32.totalorder %s16, 1
      %p97 = por %p95, %p96
      %p98 = scmp.ne.s32.totalorder %s89, %s90
      %p99 = scmp.eq.s32.totalorder %s16, 0
      %p100 = por %p98, %p99
      %p101 = scmp.ne.s32.totalorder %s89, %s90
      %p102 = scmp.eq.s32.totalorder %s17, 1
      %p103 = por %p101, %p102
      %p105 = scmp.ne.s32.totalorder %s90, %s104
      %p106 = scmp.eq.s32.totalorder %s17, 0
      %p107 = por %p105, %p106
      %s108 = ssub.s32 %s11, %s18
      %p109 = scmp.eq.s32.totalorder %s108, 0
      %s111 = sadd.s32 %s110, 1
      %s112 = scalar_select %p109, %s110, %s111
      %p115 = pneg %p109
      %p116 = scmp.eq.s32.totalorder %s11, 1
      %p117 = por %p115, %p116
      %p118 = scmp.ne.s32.totalorder %s110, %s113
      %p119 = scmp.eq.s32.totalorder %s11, 0
      %p120 = por %p118, %p119
      %p121 = scmp.ne.s32.totalorder %s110, %s113
      %p122 = scmp.eq.s32.totalorder %s16, 1
      %p123 = por %p121, %p122
      %p124 = scmp.ne.s32.totalorder %s113, %s114
      %p125 = scmp.eq.s32.totalorder %s16, 0
      %p126 = por %p124, %p125
      %p127 = scmp.ne.s32.totalorder %s113, %s114
      %p128 = scmp.eq.s32.totalorder %s17, 1
      %p129 = por %p127, %p128
      %p131 = scmp.ne.s32.totalorder %s114, %s130
      %p132 = scmp.eq.s32.totalorder %s17, 0
      %p133 = por %p131, %p132
      %p134 = scmp.le.s32.totalorder 1, %s11
      %p135 = scmp.lt.s32.totalorder %s11, 3
      %p136 = pnand %p134, %p135
      %p137 = pneg %p136
      // Predicated region
      $region9: #{tpu_custom_call.1} parent=5 // pred_check
        _
      $region10: #{tpu_custom_call.1} parent=5 // pred_check_branch
        %139 = sbr.rel (%p136) target = $region12
      $region11: #{tpu_custom_call.1} parent=5 // pred_region
        %s140 = ssub.s32 %s11, 1
        // Predicated region
        $region13: #{tpu_custom_call.1} parent=11 // pred_check
          %p141 = pneg %p58
        $region14: #{tpu_custom_call.1} parent=11 // pred_check_branch
          %143 = sbr.rel (%p141) target = $region16
        $region15: #{tpu_custom_call.1} parent=11 // pred_region
          %s145 = ssub.s32 4608, 4608
          %146 = vsyncadd [#allocation3], %s145
          %s147 = sshll.u32 [#allocation2], 4
          %s148 = int_to_ptr.vmem [resolvable:$true] %s147
          %153 = dma.hbm_to_vmem [thread:$0]  %s1, 4608, %s148, [#allocation3], 64, 64, 4
        $region16: #{tpu_custom_call.1} parent=11 // pred_fallthru
          _
        // Predicated region
        $region17: #{tpu_custom_call.1} parent=11 // pred_check
          %p154 = pneg %p79
        $region18: #{tpu_custom_call.1} parent=11 // pred_check_branch
          %156 = sbr.rel (%p154) target = $region20
        $region19: #{tpu_custom_call.1} parent=11 // pred_region
          _
        $region20: #{tpu_custom_call.1} parent=11 // pred_fallthru
          _
        // Predicated region
        $region21: #{tpu_custom_call.1} parent=11 // pred_check
          %p157 = pneg %p100
        $region22: #{tpu_custom_call.1} parent=11 // pred_check_branch
          %159 = sbr.rel (%p157) target = $region24
        $region23: #{tpu_custom_call.1} parent=11 // pred_region
          _
        $region24: #{tpu_custom_call.1} parent=11 // pred_fallthru
          _
      $region12: #{tpu_custom_call.1} parent=5 // pred_fallthru
        _
      %p160 = scmp.lt.s32.totalorder %s11, 2
      // Predicated region
      $region25: #{tpu_custom_call.1} parent=5 // pred_check
        %p161 = pneg %p160
      $region26: #{tpu_custom_call.1} parent=5 // pred_check_branch
        %163 = sbr.rel (%p161) target = $region28
      $region27: #{tpu_custom_call.1} parent=5 // pred_region
        // Predicated region
        $region29: #{tpu_custom_call.1} parent=27 // pred_check
          %p164 = pneg %p31
        $region30: #{tpu_custom_call.1} parent=27 // pred_check_branch
          %166 = sbr.rel (%p164) target = $region32
        $region31: #{tpu_custom_call.1} parent=27 // pred_region
          %p167 = scmp.lt.s32.totalorder %s11, 1
          %s168 = scalar_select %p167, %s11, 1
          %s169 = smul.addr %s168, 13
          %s170 = smul.addr %s169, 4
          %s171 = scalar_lea.vmem %s0, %s170
        $region32: #{tpu_custom_call.1} parent=27 // pred_fallthru
          _
      $region28: #{tpu_custom_call.1} parent=5 // pred_fallthru
        _
      %p172 = scmp.le.s32.totalorder 1, %s11
      %p173 = scmp.lt.s32.totalorder %s11, 3
      %p174 = pnand %p172, %p173
      %p175 = pneg %p174
      // Predicated region
      $region33: #{tpu_custom_call.1} parent=5 // pred_check
        _
      $region34: #{tpu_custom_call.1} parent=5 // pred_check_branch
        %177 = sbr.rel (%p174) target = $region36
      $region35: #{tpu_custom_call.1} parent=5 // pred_region
        %s178 = ssub.s32 %s11, 1
        // Predicated region
        $region37: #{tpu_custom_call.1} parent=35 // pred_check
          %p179 = pneg %p58
        $region38: #{tpu_custom_call.1} parent=35 // pred_check_branch
          %181 = sbr.rel (%p179) target = $region40
        $region39: #{tpu_custom_call.1} parent=35 // pred_region
          %182 = dma.done [#allocation3], 4608
        $region40: #{tpu_custom_call.1} parent=35 // pred_fallthru
          _
        %p183 = scmp.lt.s32.totalorder %s16, 1
        %s184 = scalar_select %p183, %s16, 1
        %s185 = smul.addr %s184, 13
        %s186 = smul.addr %s185, 4
        %s187 = scalar_lea.vmem %s0, %s186
        %p188 = pneg %p37
        %p189 = pneg %p34
        %p190 = pneg %p58
        %p191 = pneg %p55
        %p192 = pneg %p79
        %p193 = pneg %p76
        %p194 = pneg %p100
        %p195 = pneg %p97
        %p196 = pneg %p126
        %p197 = pneg %p123
        %p198 = scmp.lt.s32.totalorder %s16, 1
        %s199 = scalar_select %p198, %s16, 1
        %s200 = smul.addr %s199, 13
        %s201 = smul.addr %s200, 4
        %s202 = scalar_lea.vmem %s4, %s201
        %p203 = scmp.lt.s32.totalorder %s16, 1
        %s204 = scalar_select %p203, %s16, 1
        %s205 = smul.addr %s204, 13
        %s206 = smul.addr %s205, 4
        %s207 = scalar_lea.vmem %s0, %s206
        %p208 = scmp.lt.s32.totalorder %s16, 1
        %s209 = scalar_select %p208, %s16, 1
        %s210 = smul.addr %s209, 13
        %s211 = smul.addr %s210, 4
        %s212 = scalar_lea.vmem %s4, %s211
        %v214 = vld [vmem:[%s207] sm:$0xf]
        %v215 = vld [vmem:[%s207 + $0x4] sm:$0xf]
        %v216 = vld [vmem:[%s207 + $0x8] sm:$0xf]
        %v217 = vld [vmem:[%s207 + $0xc] sm:$0xf]
        %v218 = vld [vmem:[%s207 + $0x10] sm:$0xf]
        %v219 = vld [vmem:[%s207 + $0x14] sm:$0xf]
        %v220 = vld [vmem:[%s207 + $0x18] sm:$0xf]
        %v221 = vld [vmem:[%s207 + $0x1c] sm:$0xf]
        %v222 = vld [vmem:[%s207 + $0x20] sm:$0xf]
        %v223 = vld [vmem:[%s207 + $0x24] sm:$0x7]
        %v224 = vld [vmem:[#allocation2] sm:$0xf]
        %v225 = vld [vmem:[#allocation2 + $0x4] sm:$0xf]
        %v226 = vld [vmem:[#allocation2 + $0x8] sm:$0xf]
        %v227 = vld [vmem:[#allocation2 + $0xc] sm:$0xf]
        %v228 = vld [vmem:[#allocation2 + $0x10] sm:$0xf]
        %v229 = vld [vmem:[#allocation2 + $0x14] sm:$0xf]
        %v230 = vld [vmem:[#allocation2 + $0x18] sm:$0xf]
        %v231 = vld [vmem:[#allocation2 + $0x1c] sm:$0xf]
        %v232 = vld [vmem:[%s207 + $0x24] sm:$0xf]
        %s233 = scalar_lea.vmem [#allocation2], 32
        %v234 = vld [vmem:[%s233] sm:$0xf]
        %v235 = vld [vmem:[%s233 + $0x4] sm:$0xf]
        %v236 = vld [vmem:[%s233 + $0x8] sm:$0xf]
        %v237 = vld [vmem:[%s233 + $0xc] sm:$0xf]
        %v238 = vld [vmem:[%s233 + $0x10] sm:$0xf]
        %v239 = vld [vmem:[%s233 + $0x14] sm:$0xf]
        %v240 = vld [vmem:[%s233 + $0x18] sm:$0xf]
        %v241 = vld [vmem:[%s233 + $0x1c] sm:$0xf]
        %v252 = vunpack.c.l.b16 %v214
        %v253 = vunpack.c.l.b16 %v215
        %v254 = vunpack.c.l.b16 %v216
        %v255 = vunpack.c.l.b16 %v217
        %v256 = vunpack.c.l.b16 %v218
        %v257 = vunpack.c.l.b16 %v219
        %v258 = vunpack.c.l.b16 %v220
        %v259 = vunpack.c.l.b16 %v221
        %v260 = vunpack.c.l.b16 %v222
        %v261 = vunpack.c.l.b16 %v232
        %v262 = vpack.c.b16 %v253, %v252
        %v263 = vpack.c.b16 %v255, %v254
        %v264 = vpack.c.b16 %v257, %v256
        %v265 = vpack.c.b16 %v259, %v258
        %v266 = vpack.c.b16 %v261, %v260
        %vm267 = vsmask.f32 7424
        %v269 = vshrl.u32 %v262, 16
        %v271 = vshll.u32 %v262, 16
        %v273 = vrot.slane %v271, 1
        %v274 = vor.u32 %v269, %v273
        %v276 = vshll.u32 %v263, 16
        %v278 = vrot.slane %v276, 1
        %v279 = vsel %vm267, %v274, %v278
        %v280 = vshrl.u32 %v263, 16
        %v282 = vor.u32 %v280, %v278
        %v284 = vshll.u32 %v264, 16
        %v286 = vrot.slane %v284, 1
        %v287 = vsel %vm267, %v282, %v286
        %v288 = vshrl.u32 %v264, 16
        %v290 = vor.u32 %v288, %v286
        %v292 = vshll.u32 %v265, 16
        %v294 = vrot.slane %v292, 1
        %v295 = vsel %vm267, %v290, %v294
        %v296 = vshrl.u32 %v265, 16
        %v298 = vor.u32 %v296, %v294
        %v300 = vshll.u32 %v266, 16
        %v302 = vrot.slane %v300, 1
        %v303 = vsel %vm267, %v298, %v302
        %v304 = vshrl.u32 %v266, 16
        %v306 = vor.u32 %v304, %v302
        %v315 = vunpack.c.l.b16 %v234
        %v316 = vunpack.c.l.b16 %v235
        %v317 = vunpack.c.l.b16 %v236
        %v318 = vunpack.c.l.b16 %v237
        %v319 = vunpack.c.l.b16 %v238
        %v320 = vunpack.c.l.b16 %v239
        %v321 = vunpack.c.l.b16 %v240
        %v322 = vunpack.c.l.b16 %v241
        %v323 = vpack.c.b16 %v316, %v315
        %v324 = vpack.c.b16 %v318, %v317
        %v325 = vpack.c.b16 %v320, %v319
        %v326 = vpack.c.b16 %v322, %v321
        %vm331 = vcmask 523264
        %v333 = vsel %vm331, %v279, 0
        %v336 = vsel %vm331, %v287, 0
        %v339 = vsel %vm331, %v295, 0
        %v342 = vsel %vm331, %v303, 0
        %v345 = vsel %vm331, %v306, 0
        %347 = vmatprep.subr.bf16.mxu0 0
        %348 = vmatpush1.bf16.msra.mxu0 %v323
        %349 = vmatprep.subr.bf16.mxu0 0
        %350 = vmatpush1.bf16.msra.mxu0 %v324
        %351 = vmatprep.subr.bf16.mxu0 0
        %352 = vmatpush1.bf16.msra.mxu0 %v325
        %353 = vmatprep.subr.bf16.mxu0 0
        %354 = vmatpush1.bf16.msra.mxu0 %v326
        %355 = vmatprep.subr.bf16.mxu0 0
        %356 = vmatpush1.bf16.msra.mxu0 0
        %357 = vmatprep.subr.bf16.mxu0 0
        %358 = vmatpush1.bf16.msra.mxu0 0
        %359 = vmatprep.subr.bf16.mxu0 0
        %360 = vmatpush1.bf16.msra.mxu0 0
        %361 = vmatprep.subr.bf16.mxu0 0
        %362 = vmatpush1.bf16.msra.mxu0 0
        %363 = vmatprep.subr.bf16.mxu0 0
        %364 = vmatpush1.bf16.msra.mxu0 0
        %365 = vmatprep.subr.bf16.mxu0 0
        %366 = vmatpush1.bf16.msra.mxu0 0
        %367 = vmatprep.subr.bf16.mxu0 0
        %368 = vmatpush1.bf16.msra.mxu0 0
        %369 = vmatprep.subr.bf16.mxu0 0
        %370 = vmatpush1.bf16.msra.mxu0 0
        %371 = vmatprep.subr.bf16.mxu0 0
        %372 = vmatpush1.bf16.msra.mxu0 0
        %373 = vmatprep.subr.bf16.mxu0 0
        %374 = vmatpush1.bf16.msra.mxu0 0
        %375 = vmatprep.subr.bf16.mxu0 0
        %376 = vmatpush1.bf16.msra.mxu0 0
        %377 = vmatprep.subr.bf16.mxu0 0
        %378 = vmatpush1.bf16.msra.mxu0 0
        %379 = vmatprep.mubr.bf16.mxu0 0
        %380 = vmatmul.mubr.bf16.gmra.mrb[0].mxu0 %v333
        %v381 = vpop.f32.mrb[0].mxu0
        %v382 = vadd.f32 0.0, %v381
        %v383 = vpop.f32.mrb[0].mxu0
        %v384 = vpop.f32.mrb[0].mxu0
        %v385 = vadd.f32 0.0, %v384
        %v386 = vpop.f32.mrb[0].mxu0
        %387 = vmatprep.mubr.bf16.mxu0 0
        %388 = vmatmul.mubr.bf16.gmra.mrb[0].mxu0 %v336
        %v389 = vpop.f32.mrb[0].mxu0
        %v390 = vadd.f32 0.0, %v389
        %v391 = vpop.f32.mrb[0].mxu0
        %v392 = vpop.f32.mrb[0].mxu0
        %v393 = vadd.f32 0.0, %v392
        %v394 = vpop.f32.mrb[0].mxu0
        %395 = vmatprep.mubr.bf16.mxu0 0
        %396 = vmatmul.mubr.bf16.gmra.mrb[0].mxu0 %v339
        %v397 = vpop.f32.mrb[0].mxu0
        %v398 = vadd.f32 0.0, %v397
        %v399 = vpop.f32.mrb[0].mxu0
        %v400 = vpop.f32.mrb[0].mxu0
        %v401 = vadd.f32 0.0, %v400
        %v402 = vpop.f32.mrb[0].mxu0
        %403 = vmatprep.mubr.bf16.mxu0 0
        %404 = vmatmul.mubr.bf16.gmra.mrb[0].mxu0 %v342
        %v405 = vpop.f32.mrb[0].mxu0
        %v406 = vadd.f32 0.0, %v405
        %v407 = vpop.f32.mrb[0].mxu0
        %v408 = vpop.f32.mrb[0].mxu0
        %v409 = vadd.f32 0.0, %v408
        %v410 = vpop.f32.mrb[0].mxu0
        %411 = vmatprep.mubr.bf16.mxu0 0
        %412 = vmatmul.mubr.bf16.gmra.mrb[0].mxu0 %v345
        %v413 = vpop.f32.mrb[0].mxu0
        %v414 = vadd.f32 0.0, %v413
        %v415 = vpop.f32.mrb[0].mxu0
        %v416 = vpop.f32.mrb[0].mxu0
        %v417 = vadd.f32 0.0, %v416
        %v418 = vpop.f32.mrb[0].mxu0
        %419 = vdwg.mxu0
        %v421 = vunpack.c.l.b16 %v223
        %v422 = vpack.c.b16 %v421, %v260
        %v431 = vunpack.c.l.b16 %v224
        %v432 = vunpack.c.l.b16 %v225
        %v433 = vunpack.c.l.b16 %v226
        %v434 = vunpack.c.l.b16 %v227
        %v435 = vunpack.c.l.b16 %v228
        %v436 = vunpack.c.l.b16 %v229
        %v437 = vunpack.c.l.b16 %v230
        %v438 = vunpack.c.l.b16 %v231
        %v439 = vpack.c.b16 %v432, %v431
        %v440 = vpack.c.b16 %v434, %v433
        %v441 = vpack.c.b16 %v436, %v435
        %v442 = vpack.c.b16 %v438, %v437
        %v447 = vsel %vm331, %v262, 0
        %v449 = vsel %vm331, %v263, 0
        %v451 = vsel %vm331, %v264, 0
        %v453 = vsel %vm331, %v265, 0
        %v456 = vsel %vm331, %v422, 0
        %458 = vmatprep.subr.bf16.mxu0 0
        %459 = vmatpush1.bf16.msra.mxu0 %v439
        %460 = vmatprep.subr.bf16.mxu0 0
        %461 = vmatpush1.bf16.msra.mxu0 %v440
        %462 = vmatprep.subr.bf16.mxu0 0
        %463 = vmatpush1.bf16.msra.mxu0 %v441
        %464 = vmatprep.subr.bf16.mxu0 0
        %465 = vmatpush1.bf16.msra.mxu0 %v442
        %466 = vmatprep.subr.bf16.mxu0 0
        %467 = vmatpush1.bf16.msra.mxu0 0
        %468 = vmatprep.subr.bf16.mxu0 0
        %469 = vmatpush1.bf16.msra.mxu0 0
        %470 = vmatprep.subr.bf16.mxu0 0
        %471 = vmatpush1.bf16.msra.mxu0 0
        %472 = vmatprep.subr.bf16.mxu0 0
        %473 = vmatpush1.bf16.msra.mxu0 0
        %474 = vmatprep.subr.bf16.mxu0 0
        %475 = vmatpush1.bf16.msra.mxu0 0
        %476 = vmatprep.subr.bf16.mxu0 0
        %477 = vmatpush1.bf16.msra.mxu0 0
        %478 = vmatprep.subr.bf16.mxu0 0
        %479 = vmatpush1.bf16.msra.mxu0 0
        %480 = vmatprep.subr.bf16.mxu0 0
        %481 = vmatpush1.bf16.msra.mxu0 0
        %482 = vmatprep.subr.bf16.mxu0 0
        %483 = vmatpush1.bf16.msra.mxu0 0
        %484 = vmatprep.subr.bf16.mxu0 0
        %485 = vmatpush1.bf16.msra.mxu0 0
        %486 = vmatprep.subr.bf16.mxu0 0
        %487 = vmatpush1.bf16.msra.mxu0 0
        %488 = vmatprep.subr.bf16.mxu0 0
        %489 = vmatpush1.bf16.msra.mxu0 0
        %490 = vmatprep.mubr.bf16.mxu0 0
        %491 = vmatmul.mubr.bf16.gmra.mrb[0].mxu0 %v447
        %v492 = vpop.f32.mrb[0].mxu0
        %v493 = vadd.f32 %v382, %v492
        %v494 = vpop.f32.mrb[0].mxu0
        %v495 = vpop.f32.mrb[0].mxu0
        %v496 = vadd.f32 %v385, %v495
        %v497 = vpop.f32.mrb[0].mxu0
        %498 = vmatprep.mubr.bf16.mxu0 0
        %499 = vmatmul.mubr.bf16.gmra.mrb[0].mxu0 %v449
        %v500 = vpop.f32.mrb[0].mxu0
        %v501 = vadd.f32 %v390, %v500
        %v502 = vpop.f32.mrb[0].mxu0
        %v503 = vpop.f32.mrb[0].mxu0
        %v504 = vadd.f32 %v393, %v503
        %v505 = vpop.f32.mrb[0].mxu0
        %506 = vmatprep.mubr.bf16.mxu0 0
        %507 = vmatmul.mubr.bf16.gmra.mrb[0].mxu0 %v451
        %v508 = vpop.f32.mrb[0].mxu0
        %v509 = vadd.f32 %v398, %v508
        %v510 = vpop.f32.mrb[0].mxu0
        %v511 = vpop.f32.mrb[0].mxu0
        %v512 = vadd.f32 %v401, %v511
        %v513 = vpop.f32.mrb[0].mxu0
        %514 = vmatprep.mubr.bf16.mxu0 0
        %515 = vmatmul.mubr.bf16.gmra.mrb[0].mxu0 %v453
        %v516 = vpop.f32.mrb[0].mxu0
        %v517 = vadd.f32 %v406, %v516
        %v518 = vpop.f32.mrb[0].mxu0
        %v519 = vpop.f32.mrb[0].mxu0
        %v520 = vadd.f32 %v409, %v519
        %v521 = vpop.f32.mrb[0].mxu0
        %522 = vmatprep.mubr.bf16.mxu0 0
        %523 = vmatmul.mubr.bf16.gmra.mrb[0].mxu0 %v456
        %v524 = vpop.f32.mrb[0].mxu0
        %v525 = vadd.f32 %v414, %v524
        %v526 = vpop.f32.mrb[0].mxu0
        %v527 = vpop.f32.mrb[0].mxu0
        %v528 = vadd.f32 %v417, %v527
        %v529 = vpop.f32.mrb[0].mxu0
        %530 = vdwg.mxu0
        %v531 = vld [vmem:[%s207] sm:$0xe]
        %s532 = scalar_lea.vmem [#allocation2], 64
        %v533 = vld [vmem:[%s532] sm:$0xf]
        %v534 = vld [vmem:[%s532 + $0x4] sm:$0xf]
        %v535 = vld [vmem:[%s532 + $0x8] sm:$0xf]
        %v536 = vld [vmem:[%s532 + $0xc] sm:$0xf]
        %v537 = vld [vmem:[%s532 + $0x10] sm:$0xf]
        %v538 = vld [vmem:[%s532 + $0x14] sm:$0xf]
        %v539 = vld [vmem:[%s532 + $0x18] sm:$0xf]
        %v540 = vld [vmem:[%s532 + $0x1c] sm:$0xf]
        %v542 = vunpack.c.l.b16 %v531
        %v543 = vpack.c.b16 %v253, %v542
        %vm544 = vcmask 1046528
        %v545 = vrot.slane %v543, 1
        %v546 = vrot.slane %v263, 1
        %v547 = vsel %vm544, %v545, %v546
        %v548 = vrot.slane %v264, 1
        %v549 = vsel %vm544, %v546, %v548
        %v550 = vrot.slane %v265, 1
        %v551 = vsel %vm544, %v548, %v550
        %v552 = vrot.slane %v266, 1
        %v553 = vsel %vm544, %v550, %v552
        %v562 = vunpack.c.l.b16 %v533
        %v563 = vunpack.c.l.b16 %v534
        %v564 = vunpack.c.l.b16 %v535
        %v565 = vunpack.c.l.b16 %v536
        %v566 = vunpack.c.l.b16 %v537
        %v567 = vunpack.c.l.b16 %v538
        %v568 = vunpack.c.l.b16 %v539
        %v569 = vunpack.c.l.b16 %v540
        %v570 = vpack.c.b16 %v563, %v562
        %v571 = vpack.c.b16 %v565, %v564
        %v572 = vpack.c.b16 %v567, %v566
        %v573 = vpack.c.b16 %v569, %v568
        %v579 = vsel %vm331, %v547, 0
        %v582 = vsel %vm331, %v549, 0
        %v585 = vsel %vm331, %v551, 0
        %v588 = vsel %vm331, %v553, 0
        %v591 = vsel %vm331, %v552, 0
        %593 = vmatprep.subr.bf16.mxu0 0
        %594 = vmatpush1.bf16.msra.mxu0 %v570
        %595 = vmatprep.subr.bf16.mxu0 0
        %596 = vmatpush1.bf16.msra.mxu0 %v571
        %597 = vmatprep.subr.bf16.mxu0 0
        %598 = vmatpush1.bf16.msra.mxu0 %v572
        %599 = vmatprep.subr.bf16.mxu0 0
        %600 = vmatpush1.bf16.msra.mxu0 %v573
        %601 = vmatprep.subr.bf16.mxu0 0
        %602 = vmatpush1.bf16.msra.mxu0 0
        %603 = vmatprep.subr.bf16.mxu0 0
        %604 = vmatpush1.bf16.msra.mxu0 0
        %605 = vmatprep.subr.bf16.mxu0 0
        %606 = vmatpush1.bf16.msra.mxu0 0
        %607 = vmatprep.subr.bf16.mxu0 0
        %608 = vmatpush1.bf16.msra.mxu0 0
        %609 = vmatprep.subr.bf16.mxu0 0
        %610 = vmatpush1.bf16.msra.mxu0 0
        %611 = vmatprep.subr.bf16.mxu0 0
        %612 = vmatpush1.bf16.msra.mxu0 0
        %613 = vmatprep.subr.bf16.mxu0 0
        %614 = vmatpush1.bf16.msra.mxu0 0
        %615 = vmatprep.subr.bf16.mxu0 0
        %616 = vmatpush1.bf16.msra.mxu0 0
        %617 = vmatprep.subr.bf16.mxu0 0
        %618 = vmatpush1.bf16.msra.mxu0 0
        %619 = vmatprep.subr.bf16.mxu0 0
        %620 = vmatpush1.bf16.msra.mxu0 0
        %621 = vmatprep.subr.bf16.mxu0 0
        %622 = vmatpush1.bf16.msra.mxu0 0
        %623 = vmatprep.subr.bf16.mxu0 0
        %624 = vmatpush1.bf16.msra.mxu0 0
        %625 = vmatprep.mubr.bf16.mxu0 0
        %626 = vmatmul.mubr.bf16.gmra.mrb[0].mxu0 %v579
        %v627 = vpop.f32.mrb[0].mxu0
        %v628 = vadd.f32 0.0, %v627
        %v629 = vpop.f32.mrb[0].mxu0
        %v630 = vpop.f32.mrb[0].mxu0
        %v631 = vadd.f32 0.0, %v630
        %v632 = vpop.f32.mrb[0].mxu0
        %633 = vmatprep.mubr.bf16.mxu0 0
        %634 = vmatmul.mubr.bf16.gmra.mrb[0].mxu0 %v582
        %v635 = vpop.f32.mrb[0].mxu0
        %v636 = vadd.f32 0.0, %v635
        %v637 = vpop.f32.mrb[0].mxu0
        %v638 = vpop.f32.mrb[0].mxu0
        %v639 = vadd.f32 0.0, %v638
        %v640 = vpop.f32.mrb[0].mxu0
        %641 = vmatprep.mubr.bf16.mxu0 0
        %642 = vmatmul.mubr.bf16.gmra.mrb[0].mxu0 %v585
        %v643 = vpop.f32.mrb[0].mxu0
        %v644 = vadd.f32 0.0, %v643
        %v645 = vpop.f32.mrb[0].mxu0
        %v646 = vpop.f32.mrb[0].mxu0
        %v647 = vadd.f32 0.0, %v646
        %v648 = vpop.f32.mrb[0].mxu0
        %649 = vmatprep.mubr.bf16.mxu0 0
        %650 = vmatmul.mubr.bf16.gmra.mrb[0].mxu0 %v588
        %v651 = vpop.f32.mrb[0].mxu0
        %v652 = vadd.f32 0.0, %v651
        %v653 = vpop.f32.mrb[0].mxu0
        %v654 = vpop.f32.mrb[0].mxu0
        %v655 = vadd.f32 0.0, %v654
        %v656 = vpop.f32.mrb[0].mxu0
        %657 = vmatprep.mubr.bf16.mxu0 0
        %658 = vmatmul.mubr.bf16.gmra.mrb[0].mxu0 %v591
        %v659 = vpop.f32.mrb[0].mxu0
        %v660 = vadd.f32 0.0, %v659
        %v661 = vpop.f32.mrb[0].mxu0
        %v662 = vpop.f32.mrb[0].mxu0
        %v663 = vadd.f32 0.0, %v662
        %v664 = vpop.f32.mrb[0].mxu0
        %665 = vdwg.mxu0
        %v666 = vadd.f32 %v493, %v628
        %v667 = vadd.f32 %v496, %v631
        %v668 = vadd.f32 %v501, %v636
        %v669 = vadd.f32 %v504, %v639
        %v670 = vadd.f32 %v509, %v644
        %v671 = vadd.f32 %v512, %v647
        %v672 = vadd.f32 %v517, %v652
        %v673 = vadd.f32 %v520, %v655
        %v674 = vadd.f32 %v525, %v660
        %v675 = vadd.f32 %v528, %v663
        %v676 = vld [vmem:[%s207 + $0x4] sm:$0xe]
        %v677 = vld [vmem:[%s207 + $0x8] sm:$0xf]
        %v678 = vld [vmem:[%s207 + $0xc] sm:$0xf]
        %v679 = vld [vmem:[%s207 + $0x10] sm:$0xf]
        %v680 = vld [vmem:[%s207 + $0x14] sm:$0xf]
        %v681 = vld [vmem:[%s207 + $0x18] sm:$0xf]
        %v682 = vld [vmem:[%s207 + $0x1c] sm:$0xf]
        %v683 = vld [vmem:[%s207 + $0x20] sm:$0xf]
        %v684 = vld [vmem:[%s207 + $0x24] sm:$0xf]
        %v685 = vld [vmem:[%s207 + $0x28] sm:$0xf]
        %s686 = scalar_lea.vmem [#allocation2], 96
        %v687 = vld [vmem:[%s686] sm:$0xf]
        %v688 = vld [vmem:[%s686 + $0x4] sm:$0xf]
        %v689 = vld [vmem:[%s686 + $0x8] sm:$0xf]
        %v690 = vld [vmem:[%s686 + $0xc] sm:$0xf]
        %v691 = vld [vmem:[%s686 + $0x10] sm:$0xf]
        %v692 = vld [vmem:[%s686 + $0x14] sm:$0xf]
        %v693 = vld [vmem:[%s686 + $0x18] sm:$0xf]
        %v694 = vld [vmem:[%s686 + $0x1c] sm:$0xf]
        %v705 = vunpack.c.l.b16 %v676
        %v706 = vunpack.c.l.b16 %v677
        %v707 = vunpack.c.l.b16 %v678
        %v708 = vunpack.c.l.b16 %v679
        %v709 = vunpack.c.l.b16 %v680
        %v710 = vunpack.c.l.b16 %v681
        %v711 = vunpack.c.l.b16 %v682
        %v712 = vunpack.c.l.b16 %v683
        %v713 = vunpack.c.l.b16 %v684
        %v714 = vunpack.c.l.b16 %v685
        %v715 = vpack.c.b16 %v706, %v705
        %v716 = vpack.c.b16 %v708, %v707
        %v717 = vpack.c.b16 %v710, %v709
        %v718 = vpack.c.b16 %v712, %v711
        %v719 = vpack.c.b16 %v714, %v713
        %v720 = vrot.slane %v715, 1
        %v721 = vrot.slane %v716, 1
        %v722 = vsel %vm544, %v720, %v721
        %v723 = vrot.slane %v717, 1
        %v724 = vsel %vm544, %v721, %v723
        %v725 = vrot.slane %v718, 1
        %v726 = vsel %vm544, %v723, %v725
        %v727 = vrot.slane %v719, 1
        %v728 = vsel %vm544, %v725, %v727
        %v737 = vunpack.c.l.b16 %v687
        %v738 = vunpack.c.l.b16 %v688
        %v739 = vunpack.c.l.b16 %v689
        %v740 = vunpack.c.l.b16 %v690
        %v741 = vunpack.c.l.b16 %v691
        %v742 = vunpack.c.l.b16 %v692
        %v743 = vunpack.c.l.b16 %v693
        %v744 = vunpack.c.l.b16 %v694
        %v745 = vpack.c.b16 %v738, %v737
        %v746 = vpack.c.b16 %v740, %v739
        %v747 = vpack.c.b16 %v742, %v741
        %v748 = vpack.c.b16 %v744, %v743
        %v754 = vsel %vm331, %v722, 0
        %v757 = vsel %vm331, %v724, 0
        %v760 = vsel %vm331, %v726, 0
        %v763 = vsel %vm331, %v728, 0
        %v766 = vsel %vm331, %v727, 0
        %768 = vmatprep.subr.bf16.mxu0 0
        %769 = vmatpush1.bf16.msra.mxu0 %v745
        %770 = vmatprep.subr.bf16.mxu0 0
        %771 = vmatpush1.bf16.msra.mxu0 %v746
        %772 = vmatprep.subr.bf16.mxu0 0
        %773 = vmatpush1.bf16.msra.mxu0 %v747
        %774 = vmatprep.subr.bf16.mxu0 0
        %775 = vmatpush1.bf16.msra.mxu0 %v748
        %776 = vmatprep.subr.bf16.mxu0 0
        %777 = vmatpush1.bf16.msra.mxu0 0
        %778 = vmatprep.subr.bf16.mxu0 0
        %779 = vmatpush1.bf16.msra.mxu0 0
        %780 = vmatprep.subr.bf16.mxu0 0
        %781 = vmatpush1.bf16.msra.mxu0 0
        %782 = vmatprep.subr.bf16.mxu0 0
        %783 = vmatpush1.bf16.msra.mxu0 0
        %784 = vmatprep.subr.bf16.mxu0 0
        %785 = vmatpush1.bf16.msra.mxu0 0
        %786 = vmatprep.subr.bf16.mxu0 0
        %787 = vmatpush1.bf16.msra.mxu0 0
        %788 = vmatprep.subr.bf16.mxu0 0
        %789 = vmatpush1.bf16.msra.mxu0 0
        %790 = vmatprep.subr.bf16.mxu0 0
        %791 = vmatpush1.bf16.msra.mxu0 0
        %792 = vmatprep.subr.bf16.mxu0 0
        %793 = vmatpush1.bf16.msra.mxu0 0
        %794 = vmatprep.subr.bf16.mxu0 0
        %795 = vmatpush1.bf16.msra.mxu0 0
        %796 = vmatprep.subr.bf16.mxu0 0
        %797 = vmatpush1.bf16.msra.mxu0 0
        %798 = vmatprep.subr.bf16.mxu0 0
        %799 = vmatpush1.bf16.msra.mxu0 0
        %800 = vmatprep.mubr.bf16.mxu0 0
        %801 = vmatmul.mubr.bf16.gmra.mrb[0].mxu0 %v754
        %v802 = vpop.f32.mrb[0].mxu0
        %v803 = vadd.f32 0.0, %v802
        %v804 = vpop.f32.mrb[0].mxu0
        %v805 = vpop.f32.mrb[0].mxu0
        %v806 = vadd.f32 0.0, %v805
        %v807 = vpop.f32.mrb[0].mxu0
        %808 = vmatprep.mubr.bf16.mxu0 0
        %809 = vmatmul.mubr.bf16.gmra.mrb[0].mxu0 %v757
        %v810 = vpop.f32.mrb[0].mxu0
        %v811 = vadd.f32 0.0, %v810
        %v812 = vpop.f32.mrb[0].mxu0
        %v813 = vpop.f32.mrb[0].mxu0
        %v814 = vadd.f32 0.0, %v813
        %v815 = vpop.f32.mrb[0].mxu0
        %816 = vmatprep.mubr.bf16.mxu0 0
        %817 = vmatmul.mubr.bf16.gmra.mrb[0].mxu0 %v760
        %v818 = vpop.f32.mrb[0].mxu0
        %v819 = vadd.f32 0.0, %v818
        %v820 = vpop.f32.mrb[0].mxu0
        %v821 = vpop.f32.mrb[0].mxu0
        %v822 = vadd.f32 0.0, %v821
        %v823 = vpop.f32.mrb[0].mxu0
        %824 = vmatprep.mubr.bf16.mxu0 0
        %825 = vmatmul.mubr.bf16.gmra.mrb[0].mxu0 %v763
        %v826 = vpop.f32.mrb[0].mxu0
        %v827 = vadd.f32 0.0, %v826
        %v828 = vpop.f32.mrb[0].mxu0
        %v829 = vpop.f32.mrb[0].mxu0
        %v830 = vadd.f32 0.0, %v829
        %v831 = vpop.f32.mrb[0].mxu0
        %832 = vmatprep.mubr.bf16.mxu0 0
        %833 = vmatmul.mubr.bf16.gmra.mrb[0].mxu0 %v766
        %v834 = vpop.f32.mrb[0].mxu0
        %v835 = vadd.f32 0.0, %v834
        %v836 = vpop.f32.mrb[0].mxu0
        %v837 = vpop.f32.mrb[0].mxu0
        %v838 = vadd.f32 0.0, %v837
        %v839 = vpop.f32.mrb[0].mxu0
        %840 = vdwg.mxu0
        %v841 = vadd.f32 %v666, %v803
        %v842 = vadd.f32 %v667, %v806
        %v843 = vadd.f32 %v668, %v811
        %v844 = vadd.f32 %v669, %v814
        %v845 = vadd.f32 %v670, %v819
        %v846 = vadd.f32 %v671, %v822
        %v847 = vadd.f32 %v672, %v827
        %v848 = vadd.f32 %v673, %v830
        %v849 = vadd.f32 %v674, %v835
        %v850 = vadd.f32 %v675, %v838
        %v851 = vld [vmem:[%s207 + $0x4] sm:$0xe]
        %v852 = vld [vmem:[%s207 + $0x8] sm:$0xf]
        %v853 = vld [vmem:[%s207 + $0xc] sm:$0xf]
        %v854 = vld [vmem:[%s207 + $0x10] sm:$0xf]
        %v855 = vld [vmem:[%s207 + $0x14] sm:$0xf]
        %v856 = vld [vmem:[%s207 + $0x18] sm:$0xf]
        %v857 = vld [vmem:[%s207 + $0x1c] sm:$0xf]
        %v858 = vld [vmem:[%s207 + $0x20] sm:$0xf]
        %v859 = vld [vmem:[%s207 + $0x24] sm:$0xf]
        %v860 = vld [vmem:[%s207 + $0x28] sm:$0xf]
        %v861 = vld [vmem:[%s207 + $0x2c] sm:$0x1]
        %s862 = scalar_lea.vmem [#allocation2], 128
        %v863 = vld [vmem:[%s862] sm:$0xf]
        %v864 = vld [vmem:[%s862 + $0x4] sm:$0xf]
        %v865 = vld [vmem:[%s862 + $0x8] sm:$0xf]
        %v866 = vld [vmem:[%s862 + $0xc] sm:$0xf]
        %v867 = vld [vmem:[%s862 + $0x10] sm:$0xf]
        %v868 = vld [vmem:[%s862 + $0x14] sm:$0xf]
        %v869 = vld [vmem:[%s862 + $0x18] sm:$0xf]
        %v870 = vld [vmem:[%s862 + $0x1c] sm:$0xf]
        %v882 = vunpack.c.l.b16 %v851
        %v883 = vunpack.c.l.b16 %v852
        %v884 = vunpack.c.l.b16 %v853
        %v885 = vunpack.c.l.b16 %v854
        %v886 = vunpack.c.l.b16 %v855
        %v887 = vunpack.c.l.b16 %v856
        %v888 = vunpack.c.l.b16 %v857
        %v889 = vunpack.c.l.b16 %v858
        %v890 = vunpack.c.l.b16 %v859
        %v891 = vunpack.c.l.b16 %v860
        %v892 = vunpack.c.l.b16 %v861
        %v893 = vpack.c.b16 %v883, %v882
        %v894 = vpack.c.b16 %v885, %v884
        %v895 = vpack.c.b16 %v887, %v886
        %v896 = vpack.c.b16 %v889, %v888
        %v897 = vpack.c.b16 %v891, %v890
        %v898 = vpack.c.b16 %v892, %v892
        %vm899 = vsmask.f32 6400
        %v901 = vshrl.u32 %v893, 16
        %v903 = vrot.slane %v901, 1
        %v904 = vshll.u32 %v893, 16
        %v906 = vrot.slane %v904, 2
        %v907 = vor.u32 %v903, %v906
        %v909 = vshrl.u32 %v894, 16
        %v911 = vrot.slane %v909, 1
        %v912 = vshll.u32 %v894, 16
        %v914 = vrot.slane %v912, 2
        %v915 = vor.u32 %v911, %v914
        %v916 = vsel %vm899, %v907, %v915
        %v918 = vshrl.u32 %v895, 16
        %v920 = vrot.slane %v918, 1
        %v921 = vshll.u32 %v895, 16
        %v923 = vrot.slane %v921, 2
        %v924 = vor.u32 %v920, %v923
        %v925 = vsel %vm899, %v915, %v924
        %v927 = vshrl.u32 %v896, 16
        %v929 = vrot.slane %v927, 1
        %v930 = vshll.u32 %v896, 16
        %v932 = vrot.slane %v930, 2
        %v933 = vor.u32 %v929, %v932
        %v934 = vsel %vm899, %v924, %v933
        %v936 = vshrl.u32 %v897, 16
        %v938 = vrot.slane %v936, 1
        %v939 = vshll.u32 %v897, 16
        %v941 = vrot.slane %v939, 2
        %v942 = vor.u32 %v938, %v941
        %v943 = vsel %vm899, %v933, %v942
        %v945 = vshll.u32 %v898, 16
        %v947 = vrot.slane %v945, 2
        %v948 = vsel %vm899, %v942, %v947
        %v957 = vunpack.c.l.b16 %v863
        %v958 = vunpack.c.l.b16 %v864
        %v959 = vunpack.c.l.b16 %v865
        %v960 = vunpack.c.l.b16 %v866
        %v961 = vunpack.c.l.b16 %v867
        %v962 = vunpack.c.l.b16 %v868
        %v963 = vunpack.c.l.b16 %v869
        %v964 = vunpack.c.l.b16 %v870
        %v965 = vpack.c.b16 %v958, %v957
        %v966 = vpack.c.b16 %v960, %v959
        %v967 = vpack.c.b16 %v962, %v961
        %v968 = vpack.c.b16 %v964, %v963
        %v974 = vsel %vm331, %v916, 0
        %v977 = vsel %vm331, %v925, 0
        %v980 = vsel %vm331, %v934, 0
        %v983 = vsel %vm331, %v943, 0
        %v986 = vsel %vm331, %v948, 0
        %988 = vmatprep.subr.bf16.mxu0 0
        %989 = vmatpush1.bf16.msra.mxu0 %v965
        %990 = vmatprep.subr.bf16.mxu0 0
        %991 = vmatpush1.bf16.msra.mxu0 %v966
        %992 = vmatprep.subr.bf16.mxu0 0
        %993 = vmatpush1.bf16.msra.mxu0 %v967
        %994 = vmatprep.subr.bf16.mxu0 0
        %995 = vmatpush1.bf16.msra.mxu0 %v968
        %996 = vmatprep.subr.bf16.mxu0 0
        %997 = vmatpush1.bf16.msra.mxu0 0
        %998 = vmatprep.subr.bf16.mxu0 0
        %999 = vmatpush1.bf16.msra.mxu0 0
        %1000 = vmatprep.subr.bf16.mxu0 0
        %1001 = vmatpush1.bf16.msra.mxu0 0
        %1002 = vmatprep.subr.bf16.mxu0 0
        %1003 = vmatpush1.bf16.msra.mxu0 0
        %1004 = vmatprep.subr.bf16.mxu0 0
        %1005 = vmatpush1.bf16.msra.mxu0 0
        %1006 = vmatprep.subr.bf16.mxu0 0
        %1007 = vmatpush1.bf16.msra.mxu0 0
        %1008 = vmatprep.subr.bf16.mxu0 0
        %1009 = vmatpush1.bf16.msra.mxu0 0
        %1010 = vmatprep.subr.bf16.mxu0 0
        %1011 = vmatpush1.bf16.msra.mxu0 0
        %1012 = vmatprep.subr.bf16.mxu0 0
        %1013 = vmatpush1.bf16.msra.mxu0 0
        %1014 = vmatprep.subr.bf16.mxu0 0
        %1015 = vmatpush1.bf16.msra.mxu0 0
        %1016 = vmatprep.subr.bf16.mxu0 0
        %1017 = vmatpush1.bf16.msra.mxu0 0
        %1018 = vmatprep.subr.bf16.mxu0 0
        %1019 = vmatpush1.bf16.msra.mxu0 0
        %1020 = vmatprep.mubr.bf16.mxu0 0
        %1021 = vmatmul.mubr.bf16.gmra.mrb[0].mxu0 %v974
        %v1022 = vpop.f32.mrb[0].mxu0
        %v1023 = vadd.f32 0.0, %v1022
        %v1024 = vpop.f32.mrb[0].mxu0
        %v1025 = vpop.f32.mrb[0].mxu0
        %v1026 = vadd.f32 0.0, %v1025
        %v1027 = vpop.f32.mrb[0].mxu0
        %1028 = vmatprep.mubr.bf16.mxu0 0
        %1029 = vmatmul.mubr.bf16.gmra.mrb[0].mxu0 %v977
        %v1030 = vpop.f32.mrb[0].mxu0
        %v1031 = vadd.f32 0.0, %v1030
        %v1032 = vpop.f32.mrb[0].mxu0
        %v1033 = vpop.f32.mrb[0].mxu0
        %v1034 = vadd.f32 0.0, %v1033
        %v1035 = vpop.f32.mrb[0].mxu0
        %1036 = vmatprep.mubr.bf16.mxu0 0
        %1037 = vmatmul.mubr.bf16.gmra.mrb[0].mxu0 %v980
        %v1038 = vpop.f32.mrb[0].mxu0
        %v1039 = vadd.f32 0.0, %v1038
        %v1040 = vpop.f32.mrb[0].mxu0
        %v1041 = vpop.f32.mrb[0].mxu0
        %v1042 = vadd.f32 0.0, %v1041
        %v1043 = vpop.f32.mrb[0].mxu0
        %1044 = vmatprep.mubr.bf16.mxu0 0
        %1045 = vmatmul.mubr.bf16.gmra.mrb[0].mxu0 %v983
        %v1046 = vpop.f32.mrb[0].mxu0
        %v1047 = vadd.f32 0.0, %v1046
        %v1048 = vpop.f32.mrb[0].mxu0
        %v1049 = vpop.f32.mrb[0].mxu0
        %v1050 = vadd.f32 0.0, %v1049
        %v1051 = vpop.f32.mrb[0].mxu0
        %1052 = vmatprep.mubr.bf16.mxu0 0
        %1053 = vmatmul.mubr.bf16.gmra.mrb[0].mxu0 %v986
        %v1054 = vpop.f32.mrb[0].mxu0
        %v1055 = vadd.f32 0.0, %v1054
        %v1056 = vpop.f32.mrb[0].mxu0
        %v1057 = vpop.f32.mrb[0].mxu0
        %v1058 = vadd.f32 0.0, %v1057
        %v1059 = vpop.f32.mrb[0].mxu0
        %1060 = vdwg.mxu0
        %v1061 = vadd.f32 %v841, %v1023
        %v1062 = vadd.f32 %v842, %v1026
        %v1063 = vadd.f32 %v843, %v1031
        %v1064 = vadd.f32 %v844, %v1034
        %v1065 = vadd.f32 %v845, %v1039
        %v1066 = vadd.f32 %v846, %v1042
        %v1067 = vadd.f32 %v847, %v1047
        %v1068 = vadd.f32 %v848, %v1050
        %v1069 = vadd.f32 %v849, %v1055
        %v1070 = vadd.f32 %v850, %v1058
        %v1071 = vld [vmem:[%s207 + $0x4] sm:$0xc]
        %s1072 = scalar_lea.vmem [#allocation2], 160
        %v1073 = vld [vmem:[%s1072] sm:$0xf]
        %v1074 = vld [vmem:[%s1072 + $0x4] sm:$0xf]
        %v1075 = vld [vmem:[%s1072 + $0x8] sm:$0xf]
        %v1076 = vld [vmem:[%s1072 + $0xc] sm:$0xf]
        %v1077 = vld [vmem:[%s1072 + $0x10] sm:$0xf]
        %v1078 = vld [vmem:[%s1072 + $0x14] sm:$0xf]
        %v1079 = vld [vmem:[%s1072 + $0x18] sm:$0xf]
        %v1080 = vld [vmem:[%s1072 + $0x1c] sm:$0xf]
        %v1082 = vunpack.c.l.b16 %v1071
        %v1083 = vpack.c.b16 %v883, %v1082
        %vm1084 = vcmask 1045504
        %v1085 = vrot.slane %v1083, 2
        %v1086 = vrot.slane %v894, 2
        %v1087 = vsel %vm1084, %v1085, %v1086
        %v1088 = vrot.slane %v895, 2
        %v1089 = vsel %vm1084, %v1086, %v1088
        %v1090 = vrot.slane %v896, 2
        %v1091 = vsel %vm1084, %v1088, %v1090
        %v1092 = vrot.slane %v897, 2
        %v1093 = vsel %vm1084, %v1090, %v1092
        %v1094 = vrot.slane %v898, 2
        %v1095 = vsel %vm1084, %v1092, %v1094
        %v1104 = vunpack.c.l.b16 %v1073
        %v1105 = vunpack.c.l.b16 %v1074
        %v1106 = vunpack.c.l.b16 %v1075
        %v1107 = vunpack.c.l.b16 %v1076
        %v1108 = vunpack.c.l.b16 %v1077
        %v1109 = vunpack.c.l.b16 %v1078
        %v1110 = vunpack.c.l.b16 %v1079
        %v1111 = vunpack.c.l.b16 %v1080
        %v1112 = vpack.c.b16 %v1105, %v1104
        %v1113 = vpack.c.b16 %v1107, %v1106
        %v1114 = vpack.c.b16 %v1109, %v1108
        %v1115 = vpack.c.b16 %v1111, %v1110
        %v1121 = vsel %vm331, %v1087, 0
        %v1124 = vsel %vm331, %v1089, 0
        %v1127 = vsel %vm331, %v1091, 0
        %v1130 = vsel %vm331, %v1093, 0
        %v1133 = vsel %vm331, %v1095, 0
        %1135 = vmatprep.subr.bf16.mxu0 0
        %1136 = vmatpush1.bf16.msra.mxu0 %v1112
        %1137 = vmatprep.subr.bf16.mxu0 0
        %1138 = vmatpush1.bf16.msra.mxu0 %v1113
        %1139 = vmatprep.subr.bf16.mxu0 0
        %1140 = vmatpush1.bf16.msra.mxu0 %v1114
        %1141 = vmatprep.subr.bf16.mxu0 0
        %1142 = vmatpush1.bf16.msra.mxu0 %v1115
        %1143 = vmatprep.subr.bf16.mxu0 0
        %1144 = vmatpush1.bf16.msra.mxu0 0
        %1145 = vmatprep.subr.bf16.mxu0 0
        %1146 = vmatpush1.bf16.msra.mxu0 0
        %1147 = vmatprep.subr.bf16.mxu0 0
        %1148 = vmatpush1.bf16.msra.mxu0 0
        %1149 = vmatprep.subr.bf16.mxu0 0
        %1150 = vmatpush1.bf16.msra.mxu0 0
        %1151 = vmatprep.subr.bf16.mxu0 0
        %1152 = vmatpush1.bf16.msra.mxu0 0
        %1153 = vmatprep.subr.bf16.mxu0 0
        %1154 = vmatpush1.bf16.msra.mxu0 0
        %1155 = vmatprep.subr.bf16.mxu0 0
        %1156 = vmatpush1.bf16.msra.mxu0 0
        %1157 = vmatprep.subr.bf16.mxu0 0
        %1158 = vmatpush1.bf16.msra.mxu0 0
        %1159 = vmatprep.subr.bf16.mxu0 0
        %1160 = vmatpush1.bf16.msra.mxu0 0
        %1161 = vmatprep.subr.bf16.mxu0 0
        %1162 = vmatpush1.bf16.msra.mxu0 0
        %1163 = vmatprep.subr.bf16.mxu0 0
        %1164 = vmatpush1.bf16.msra.mxu0 0
        %1165 = vmatprep.subr.bf16.mxu0 0
        %1166 = vmatpush1.bf16.msra.mxu0 0
        %1167 = vmatprep.mubr.bf16.mxu0 0
        %1168 = vmatmul.mubr.bf16.gmra.mrb[0].mxu0 %v1121
        %v1169 = vpop.f32.mrb[0].mxu0
        %v1170 = vadd.f32 0.0, %v1169
        %v1171 = vpop.f32.mrb[0].mxu0
        %v1172 = vpop.f32.mrb[0].mxu0
        %v1173 = vadd.f32 0.0, %v1172
        %v1174 = vpop.f32.mrb[0].mxu0
        %1175 = vmatprep.mubr.bf16.mxu0 0
        %1176 = vmatmul.mubr.bf16.gmra.mrb[0].mxu0 %v1124
        %v1177 = vpop.f32.mrb[0].mxu0
        %v1178 = vadd.f32 0.0, %v1177
        %v1179 = vpop.f32.mrb[0].mxu0
        %v1180 = vpop.f32.mrb[0].mxu0
        %v1181 = vadd.f32 0.0, %v1180
        %v1182 = vpop.f32.mrb[0].mxu0
        %1183 = vmatprep.mubr.bf16.mxu0 0
        %1184 = vmatmul.mubr.bf16.gmra.mrb[0].mxu0 %v1127
        %v1185 = vpop.f32.mrb[0].mxu0
        %v1186 = vadd.f32 0.0, %v1185
        %v1187 = vpop.f32.mrb[0].mxu0
        %v1188 = vpop.f32.mrb[0].mxu0
        %v1189 = vadd.f32 0.0, %v1188
        %v1190 = vpop.f32.mrb[0].mxu0
        %1191 = vmatprep.mubr.bf16.mxu0 0
        %1192 = vmatmul.mubr.bf16.gmra.mrb[0].mxu0 %v1130
        %v1193 = vpop.f32.mrb[0].mxu0
        %v1194 = vadd.f32 0.0, %v1193
        %v1195 = vpop.f32.mrb[0].mxu0
        %v1196 = vpop.f32.mrb[0].mxu0
        %v1197 = vadd.f32 0.0, %v1196
        %v1198 = vpop.f32.mrb[0].mxu0
        %1199 = vmatprep.mubr.bf16.mxu0 0
        %1200 = vmatmul.mubr.bf16.gmra.mrb[0].mxu0 %v1133
        %v1201 = vpop.f32.mrb[0].mxu0
        %v1202 = vadd.f32 0.0, %v1201
        %v1203 = vpop.f32.mrb[0].mxu0
        %v1204 = vpop.f32.mrb[0].mxu0
        %v1205 = vadd.f32 0.0, %v1204
        %v1206 = vpop.f32.mrb[0].mxu0
        %1207 = vdwg.mxu0
        %v1208 = vadd.f32 %v1061, %v1170
        %v1209 = vadd.f32 %v1062, %v1173
        %v1210 = vadd.f32 %v1063, %v1178
        %v1211 = vadd.f32 %v1064, %v1181
        %v1212 = vadd.f32 %v1065, %v1186
        %v1213 = vadd.f32 %v1066, %v1189
        %v1214 = vadd.f32 %v1067, %v1194
        %v1215 = vadd.f32 %v1068, %v1197
        %v1216 = vadd.f32 %v1069, %v1202
        %v1217 = vadd.f32 %v1070, %v1205
        %v1218 = vld [vmem:[%s207 + $0x8] sm:$0xc]
        %v1219 = vld [vmem:[%s207 + $0xc] sm:$0xf]
        %v1220 = vld [vmem:[%s207 + $0x10] sm:$0xf]
        %v1221 = vld [vmem:[%s207 + $0x14] sm:$0xf]
        %v1222 = vld [vmem:[%s207 + $0x18] sm:$0xf]
        %v1223 = vld [vmem:[%s207 + $0x1c] sm:$0xf]
        %v1224 = vld [vmem:[%s207 + $0x20] sm:$0xf]
        %v1225 = vld [vmem:[%s207 + $0x24] sm:$0xf]
        %v1226 = vld [vmem:[%s207 + $0x28] sm:$0xf]
        %v1227 = vld [vmem:[%s207 + $0x2c] sm:$0xf]
        %v1228 = vld [vmem:[%s207 + $0x30] sm:$0x1]
        %s1229 = scalar_lea.vmem [#allocation2], 192
        %v1230 = vld [vmem:[%s1229] sm:$0xf]
        %v1231 = vld [vmem:[%s1229 + $0x4] sm:$0xf]
        %v1232 = vld [vmem:[%s1229 + $0x8] sm:$0xf]
        %v1233 = vld [vmem:[%s1229 + $0xc] sm:$0xf]
        %v1234 = vld [vmem:[%s1229 + $0x10] sm:$0xf]
        %v1235 = vld [vmem:[%s1229 + $0x14] sm:$0xf]
        %v1236 = vld [vmem:[%s1229 + $0x18] sm:$0xf]
        %v1237 = vld [vmem:[%s1229 + $0x1c] sm:$0xf]
        %v1249 = vunpack.c.l.b16 %v1218
        %v1250 = vunpack.c.l.b16 %v1219
        %v1251 = vunpack.c.l.b16 %v1220
        %v1252 = vunpack.c.l.b16 %v1221
        %v1253 = vunpack.c.l.b16 %v1222
        %v1254 = vunpack.c.l.b16 %v1223
        %v1255 = vunpack.c.l.b16 %v1224
        %v1256 = vunpack.c.l.b16 %v1225
        %v1257 = vunpack.c.l.b16 %v1226
        %v1258 = vunpack.c.l.b16 %v1227
        %v1259 = vunpack.c.l.b16 %v1228
        %v1260 = vpack.c.b16 %v1250, %v1249
        %v1261 = vpack.c.b16 %v1252, %v1251
        %v1262 = vpack.c.b16 %v1254, %v1253
        %v1263 = vpack.c.b16 %v1256, %v1255
        %v1264 = vpack.c.b16 %v1258, %v1257
        %v1265 = vpack.c.b16 %v1259, %v1259
        %v1266 = vrot.slane %v1260, 2
        %v1267 = vrot.slane %v1261, 2
        %v1268 = vsel %vm1084, %v1266, %v1267
        %v1269 = vrot.slane %v1262, 2
        %v1270 = vsel %vm1084, %v1267, %v1269
        %v1271 = vrot.slane %v1263, 2
        %v1272 = vsel %vm1084, %v1269, %v1271
        %v1273 = vrot.slane %v1264, 2
        %v1274 = vsel %vm1084, %v1271, %v1273
        %v1275 = vrot.slane %v1265, 2
        %v1276 = vsel %vm1084, %v1273, %v1275
        %v1285 = vunpack.c.l.b16 %v1230
        %v1286 = vunpack.c.l.b16 %v1231
        %v1287 = vunpack.c.l.b16 %v1232
        %v1288 = vunpack.c.l.b16 %v1233
        %v1289 = vunpack.c.l.b16 %v1234
        %v1290 = vunpack.c.l.b16 %v1235
        %v1291 = vunpack.c.l.b16 %v1236
        %v1292 = vunpack.c.l.b16 %v1237
        %v1293 = vpack.c.b16 %v1286, %v1285
        %v1294 = vpack.c.b16 %v1288, %v1287
        %v1295 = vpack.c.b16 %v1290, %v1289
        %v1296 = vpack.c.b16 %v1292, %v1291
        %v1302 = vsel %vm331, %v1268, 0
        %v1305 = vsel %vm331, %v1270, 0
        %v1308 = vsel %vm331, %v1272, 0
        %v1311 = vsel %vm331, %v1274, 0
        %v1314 = vsel %vm331, %v1276, 0
        %1316 = vmatprep.subr.bf16.mxu0 0
        %1317 = vmatpush1.bf16.msra.mxu0 %v1293
        %1318 = vmatprep.subr.bf16.mxu0 0
        %1319 = vmatpush1.bf16.msra.mxu0 %v1294
        %1320 = vmatprep.subr.bf16.mxu0 0
        %1321 = vmatpush1.bf16.msra.mxu0 %v1295
        %1322 = vmatprep.subr.bf16.mxu0 0
        %1323 = vmatpush1.bf16.msra.mxu0 %v1296
        %1324 = vmatprep.subr.bf16.mxu0 0
        %1325 = vmatpush1.bf16.msra.mxu0 0
        %1326 = vmatprep.subr.bf16.mxu0 0
        %1327 = vmatpush1.bf16.msra.mxu0 0
        %1328 = vmatprep.subr.bf16.mxu0 0
        %1329 = vmatpush1.bf16.msra.mxu0 0
        %1330 = vmatprep.subr.bf16.mxu0 0
        %1331 = vmatpush1.bf16.msra.mxu0 0
        %1332 = vmatprep.subr.bf16.mxu0 0
        %1333 = vmatpush1.bf16.msra.mxu0 0
        %1334 = vmatprep.subr.bf16.mxu0 0
        %1335 = vmatpush1.bf16.msra.mxu0 0
        %1336 = vmatprep.subr.bf16.mxu0 0
        %1337 = vmatpush1.bf16.msra.mxu0 0
        %1338 = vmatprep.subr.bf16.mxu0 0
        %1339 = vmatpush1.bf16.msra.mxu0 0
        %1340 = vmatprep.subr.bf16.mxu0 0
        %1341 = vmatpush1.bf16.msra.mxu0 0
        %1342 = vmatprep.subr.bf16.mxu0 0
        %1343 = vmatpush1.bf16.msra.mxu0 0
        %1344 = vmatprep.subr.bf16.mxu0 0
        %1345 = vmatpush1.bf16.msra.mxu0 0
        %1346 = vmatprep.subr.bf16.mxu0 0
        %1347 = vmatpush1.bf16.msra.mxu0 0
        %1348 = vmatprep.mubr.bf16.mxu0 0
        %1349 = vmatmul.mubr.bf16.gmra.mrb[0].mxu0 %v1302
        %v1350 = vpop.f32.mrb[0].mxu0
        %v1351 = vadd.f32 0.0, %v1350
        %v1352 = vpop.f32.mrb[0].mxu0
        %v1353 = vpop.f32.mrb[0].mxu0
        %v1354 = vadd.f32 0.0, %v1353
        %v1355 = vpop.f32.mrb[0].mxu0
        %1356 = vmatprep.mubr.bf16.mxu0 0
        %1357 = vmatmul.mubr.bf16.gmra.mrb[0].mxu0 %v1305
        %v1358 = vpop.f32.mrb[0].mxu0
        %v1359 = vadd.f32 0.0, %v1358
        %v1360 = vpop.f32.mrb[0].mxu0
        %v1361 = vpop.f32.mrb[0].mxu0
        %v1362 = vadd.f32 0.0, %v1361
        %v1363 = vpop.f32.mrb[0].mxu0
        %1364 = vmatprep.mubr.bf16.mxu0 0
        %1365 = vmatmul.mubr.bf16.gmra.mrb[0].mxu0 %v1308
        %v1366 = vpop.f32.mrb[0].mxu0
        %v1367 = vadd.f32 0.0, %v1366
        %v1368 = vpop.f32.mrb[0].mxu0
        %v1369 = vpop.f32.mrb[0].mxu0
        %v1370 = vadd.f32 0.0, %v1369
        %v1371 = vpop.f32.mrb[0].mxu0
        %1372 = vmatprep.mubr.bf16.mxu0 0
        %1373 = vmatmul.mubr.bf16.gmra.mrb[0].mxu0 %v1311
        %v1374 = vpop.f32.mrb[0].mxu0
        %v1375 = vadd.f32 0.0, %v1374
        %v1376 = vpop.f32.mrb[0].mxu0
        %v1377 = vpop.f32.mrb[0].mxu0
        %v1378 = vadd.f32 0.0, %v1377
        %v1379 = vpop.f32.mrb[0].mxu0
        %1380 = vmatprep.mubr.bf16.mxu0 0
        %1381 = vmatmul.mubr.bf16.gmra.mrb[0].mxu0 %v1314
        %v1382 = vpop.f32.mrb[0].mxu0
        %v1383 = vadd.f32 0.0, %v1382
        %v1384 = vpop.f32.mrb[0].mxu0
        %v1385 = vpop.f32.mrb[0].mxu0
        %v1386 = vadd.f32 0.0, %v1385
        %v1387 = vpop.f32.mrb[0].mxu0
        %1388 = vdwg.mxu0
        %v1389 = vadd.f32 %v1208, %v1351
        %v1390 = vadd.f32 %v1209, %v1354
        %v1391 = vadd.f32 %v1210, %v1359
        %v1392 = vadd.f32 %v1211, %v1362
        %v1393 = vadd.f32 %v1212, %v1367
        %v1394 = vadd.f32 %v1213, %v1370
        %v1395 = vadd.f32 %v1214, %v1375
        %v1396 = vadd.f32 %v1215, %v1378
        %v1397 = vadd.f32 %v1216, %v1383
        %v1398 = vadd.f32 %v1217, %v1386
        %v1399 = vld [vmem:[%s207 + $0x30] sm:$0x3]
        %s1400 = scalar_lea.vmem [#allocation2], 224
        %v1401 = vld [vmem:[%s1400] sm:$0xf]
        %v1402 = vld [vmem:[%s1400 + $0x4] sm:$0xf]
        %v1403 = vld [vmem:[%s1400 + $0x8] sm:$0xf]
        %v1404 = vld [vmem:[%s1400 + $0xc] sm:$0xf]
        %v1405 = vld [vmem:[%s1400 + $0x10] sm:$0xf]
        %v1406 = vld [vmem:[%s1400 + $0x14] sm:$0xf]
        %v1407 = vld [vmem:[%s1400 + $0x18] sm:$0xf]
        %v1408 = vld [vmem:[%s1400 + $0x1c] sm:$0xf]
        %v1410 = vunpack.c.l.b16 %v1399
        %v1411 = vpack.c.b16 %v1410, %v1410
        %vm1412 = vsmask.f32 5376
        %v1414 = vshrl.u32 %v1260, 16
        %v1416 = vrot.slane %v1414, 2
        %v1417 = vshll.u32 %v1260, 16
        %v1419 = vrot.slane %v1417, 3
        %v1420 = vor.u32 %v1416, %v1419
        %v1422 = vshrl.u32 %v1261, 16
        %v1424 = vrot.slane %v1422, 2
        %v1425 = vshll.u32 %v1261, 16
        %v1427 = vrot.slane %v1425, 3
        %v1428 = vor.u32 %v1424, %v1427
        %v1429 = vsel %vm1412, %v1420, %v1428
        %v1431 = vshrl.u32 %v1262, 16
        %v1433 = vrot.slane %v1431, 2
        %v1434 = vshll.u32 %v1262, 16
        %v1436 = vrot.slane %v1434, 3
        %v1437 = vor.u32 %v1433, %v1436
        %v1438 = vsel %vm1412, %v1428, %v1437
        %v1440 = vshrl.u32 %v1263, 16
        %v1442 = vrot.slane %v1440, 2
        %v1443 = vshll.u32 %v1263, 16
        %v1445 = vrot.slane %v1443, 3
        %v1446 = vor.u32 %v1442, %v1445
        %v1447 = vsel %vm1412, %v1437, %v1446
        %v1449 = vshrl.u32 %v1264, 16
        %v1451 = vrot.slane %v1449, 2
        %v1452 = vshll.u32 %v1264, 16
        %v1454 = vrot.slane %v1452, 3
        %v1455 = vor.u32 %v1451, %v1454
        %v1456 = vsel %vm1412, %v1446, %v1455
        %v1458 = vshrl.u32 %v1411, 16
        %v1460 = vrot.slane %v1458, 2
        %v1461 = vshll.u32 %v1411, 16
        %v1463 = vrot.slane %v1461, 3
        %v1464 = vor.u32 %v1460, %v1463
        %v1465 = vsel %vm1412, %v1455, %v1464
        %v1474 = vunpack.c.l.b16 %v1401
        %v1475 = vunpack.c.l.b16 %v1402
        %v1476 = vunpack.c.l.b16 %v1403
        %v1477 = vunpack.c.l.b16 %v1404
        %v1478 = vunpack.c.l.b16 %v1405
        %v1479 = vunpack.c.l.b16 %v1406
        %v1480 = vunpack.c.l.b16 %v1407
        %v1481 = vunpack.c.l.b16 %v1408
        %v1482 = vpack.c.b16 %v1475, %v1474
        %v1483 = vpack.c.b16 %v1477, %v1476
        %v1484 = vpack.c.b16 %v1479, %v1478
        %v1485 = vpack.c.b16 %v1481, %v1480
        %v1491 = vsel %vm331, %v1429, 0
        %v1494 = vsel %vm331, %v1438, 0
        %v1497 = vsel %vm331, %v1447, 0
        %v1500 = vsel %vm331, %v1456, 0
        %v1503 = vsel %vm331, %v1465, 0
        %1505 = vmatprep.subr.bf16.mxu0 0
        %1506 = vmatpush1.bf16.msra.mxu0 %v1482
        %1507 = vmatprep.subr.bf16.mxu0 0
        %1508 = vmatpush1.bf16.msra.mxu0 %v1483
        %1509 = vmatprep.subr.bf16.mxu0 0
        %1510 = vmatpush1.bf16.msra.mxu0 %v1484
        %1511 = vmatprep.subr.bf16.mxu0 0
        %1512 = vmatpush1.bf16.msra.mxu0 %v1485
        %1513 = vmatprep.subr.bf16.mxu0 0
        %1514 = vmatpush1.bf16.msra.mxu0 0
        %1515 = vmatprep.subr.bf16.mxu0 0
        %1516 = vmatpush1.bf16.msra.mxu0 0
        %1517 = vmatprep.subr.bf16.mxu0 0
        %1518 = vmatpush1.bf16.msra.mxu0 0
        %1519 = vmatprep.subr.bf16.mxu0 0
        %1520 = vmatpush1.bf16.msra.mxu0 0
        %1521 = vmatprep.subr.bf16.mxu0 0
        %1522 = vmatpush1.bf16.msra.mxu0 0
        %1523 = vmatprep.subr.bf16.mxu0 0
        %1524 = vmatpush1.bf16.msra.mxu0 0
        %1525 = vmatprep.subr.bf16.mxu0 0
        %1526 = vmatpush1.bf16.msra.mxu0 0
        %1527 = vmatprep.subr.bf16.mxu0 0
        %1528 = vmatpush1.bf16.msra.mxu0 0
        %1529 = vmatprep.subr.bf16.mxu0 0
        %1530 = vmatpush1.bf16.msra.mxu0 0
        %1531 = vmatprep.subr.bf16.mxu0 0
        %1532 = vmatpush1.bf16.msra.mxu0 0
        %1533 = vmatprep.subr.bf16.mxu0 0
        %1534 = vmatpush1.bf16.msra.mxu0 0
        %1535 = vmatprep.subr.bf16.mxu0 0
        %1536 = vmatpush1.bf16.msra.mxu0 0
        %1537 = vmatprep.mubr.bf16.mxu0 0
        %1538 = vmatmul.mubr.bf16.gmra.mrb[0].mxu0 %v1491
        %v1539 = vpop.f32.mrb[0].mxu0
        %v1540 = vadd.f32 0.0, %v1539
        %v1541 = vpop.f32.mrb[0].mxu0
        %v1542 = vpop.f32.mrb[0].mxu0
        %v1543 = vadd.f32 0.0, %v1542
        %v1544 = vpop.f32.mrb[0].mxu0
        %1545 = vmatprep.mubr.bf16.mxu0 0
        %1546 = vmatmul.mubr.bf16.gmra.mrb[0].mxu0 %v1494
        %v1547 = vpop.f32.mrb[0].mxu0
        %v1548 = vadd.f32 0.0, %v1547
        %v1549 = vpop.f32.mrb[0].mxu0
        %v1550 = vpop.f32.mrb[0].mxu0
        %v1551 = vadd.f32 0.0, %v1550
        %v1552 = vpop.f32.mrb[0].mxu0
        %1553 = vmatprep.mubr.bf16.mxu0 0
        %1554 = vmatmul.mubr.bf16.gmra.mrb[0].mxu0 %v1497
        %v1555 = vpop.f32.mrb[0].mxu0
        %v1556 = vadd.f32 0.0, %v1555
        %v1557 = vpop.f32.mrb[0].mxu0
        %v1558 = vpop.f32.mrb[0].mxu0
        %v1559 = vadd.f32 0.0, %v1558
        %v1560 = vpop.f32.mrb[0].mxu0
        %1561 = vmatprep.mubr.bf16.mxu0 0
        %1562 = vmatmul.mubr.bf16.gmra.mrb[0].mxu0 %v1500
        %v1563 = vpop.f32.mrb[0].mxu0
        %v1564 = vadd.f32 0.0, %v1563
        %v1565 = vpop.f32.mrb[0].mxu0
        %v1566 = vpop.f32.mrb[0].mxu0
        %v1567 = vadd.f32 0.0, %v1566
        %v1568 = vpop.f32.mrb[0].mxu0
        %1569 = vmatprep.mubr.bf16.mxu0 0
        %1570 = vmatmul.mubr.bf16.gmra.mrb[0].mxu0 %v1503
        %v1571 = vpop.f32.mrb[0].mxu0
        %v1572 = vadd.f32 0.0, %v1571
        %v1573 = vpop.f32.mrb[0].mxu0
        %v1574 = vpop.f32.mrb[0].mxu0
        %v1575 = vadd.f32 0.0, %v1574
        %v1576 = vpop.f32.mrb[0].mxu0
        %1577 = vdwg.mxu0
        %v1578 = vadd.f32 %v1389, %v1540
        %v1579 = vadd.f32 %v1390, %v1543
        %v1580 = vadd.f32 %v1391, %v1548
        %v1581 = vadd.f32 %v1392, %v1551
        %v1582 = vadd.f32 %v1393, %v1556
        %v1583 = vadd.f32 %v1394, %v1559
        %v1584 = vadd.f32 %v1395, %v1564
        %v1585 = vadd.f32 %v1396, %v1567
        %v1586 = vadd.f32 %v1397, %v1572
        %v1587 = vadd.f32 %v1398, %v1575
        %v1588 = vld [vmem:[%s207 + $0x8] sm:$0x8]
        %s1589 = scalar_lea.vmem [#allocation2], 256
        %v1590 = vld [vmem:[%s1589] sm:$0xf]
        %v1591 = vld [vmem:[%s1589 + $0x4] sm:$0xf]
        %v1592 = vld [vmem:[%s1589 + $0x8] sm:$0xf]
        %v1593 = vld [vmem:[%s1589 + $0xc] sm:$0xf]
        %v1594 = vld [vmem:[%s1589 + $0x10] sm:$0xf]
        %v1595 = vld [vmem:[%s1589 + $0x14] sm:$0xf]
        %v1596 = vld [vmem:[%s1589 + $0x18] sm:$0xf]
        %v1597 = vld [vmem:[%s1589 + $0x1c] sm:$0xf]
        %v1599 = vunpack.c.l.b16 %v1588
        %v1600 = vpack.c.b16 %v1250, %v1599
        %vm1601 = vcmask 1044480
        %v1602 = vrot.slane %v1600, 3
        %v1603 = vrot.slane %v1261, 3
        %v1604 = vsel %vm1601, %v1602, %v1603
        %v1605 = vrot.slane %v1262, 3
        %v1606 = vsel %vm1601, %v1603, %v1605
        %v1607 = vrot.slane %v1263, 3
        %v1608 = vsel %vm1601, %v1605, %v1607
        %v1609 = vrot.slane %v1264, 3
        %v1610 = vsel %vm1601, %v1607, %v1609
        %v1611 = vrot.slane %v1411, 3
        %v1612 = vsel %vm1601, %v1609, %v1611
        %v1621 = vunpack.c.l.b16 %v1590
        %v1622 = vunpack.c.l.b16 %v1591
        %v1623 = vunpack.c.l.b16 %v1592
        %v1624 = vunpack.c.l.b16 %v1593
        %v1625 = vunpack.c.l.b16 %v1594
        %v1626 = vunpack.c.l.b16 %v1595
        %v1627 = vunpack.c.l.b16 %v1596
        %v1628 = vunpack.c.l.b16 %v1597
        %v1629 = vpack.c.b16 %v1622, %v1621
        %v1630 = vpack.c.b16 %v1624, %v1623
        %v1631 = vpack.c.b16 %v1626, %v1625
        %v1632 = vpack.c.b16 %v1628, %v1627
        %v1638 = vsel %vm331, %v1604, 0
        %v1641 = vsel %vm331, %v1606, 0
        %v1644 = vsel %vm331, %v1608, 0
        %v1647 = vsel %vm331, %v1610, 0
        %v1650 = vsel %vm331, %v1612, 0
        %1652 = vmatprep.subr.bf16.mxu0 0
        %1653 = vmatpush1.bf16.msra.mxu0 %v1629
        %1654 = vmatprep.subr.bf16.mxu0 0
        %1655 = vmatpush1.bf16.msra.mxu0 %v1630
        %1656 = vmatprep.subr.bf16.mxu0 0
        %1657 = vmatpush1.bf16.msra.mxu0 %v1631
        %1658 = vmatprep.subr.bf16.mxu0 0
        %1659 = vmatpush1.bf16.msra.mxu0 %v1632
        %1660 = vmatprep.subr.bf16.mxu0 0
        %1661 = vmatpush1.bf16.msra.mxu0 0
        %1662 = vmatprep.subr.bf16.mxu0 0
        %1663 = vmatpush1.bf16.msra.mxu0 0
        %1664 = vmatprep.subr.bf16.mxu0 0
        %1665 = vmatpush1.bf16.msra.mxu0 0
        %1666 = vmatprep.subr.bf16.mxu0 0
        %1667 = vmatpush1.bf16.msra.mxu0 0
        %1668 = vmatprep.subr.bf16.mxu0 0
        %1669 = vmatpush1.bf16.msra.mxu0 0
        %1670 = vmatprep.subr.bf16.mxu0 0
        %1671 = vmatpush1.bf16.msra.mxu0 0
        %1672 = vmatprep.subr.bf16.mxu0 0
        %1673 = vmatpush1.bf16.msra.mxu0 0
        %1674 = vmatprep.subr.bf16.mxu0 0
        %1675 = vmatpush1.bf16.msra.mxu0 0
        %1676 = vmatprep.subr.bf16.mxu0 0
        %1677 = vmatpush1.bf16.msra.mxu0 0
        %1678 = vmatprep.subr.bf16.mxu0 0
        %1679 = vmatpush1.bf16.msra.mxu0 0
        %1680 = vmatprep.subr.bf16.mxu0 0
        %1681 = vmatpush1.bf16.msra.mxu0 0
        %1682 = vmatprep.subr.bf16.mxu0 0
        %1683 = vmatpush1.bf16.msra.mxu0 0
        %1684 = vmatprep.mubr.bf16.mxu0 0
        %1685 = vmatmul.mubr.bf16.gmra.mrb[0].mxu0 %v1638
        %v1686 = vpop.f32.mrb[0].mxu0
        %v1687 = vadd.f32 0.0, %v1686
        %v1688 = vpop.f32.mrb[0].mxu0
        %v1689 = vpop.f32.mrb[0].mxu0
        %v1690 = vadd.f32 0.0, %v1689
        %v1691 = vpop.f32.mrb[0].mxu0
        %1692 = vmatprep.mubr.bf16.mxu0 0
        %1693 = vmatmul.mubr.bf16.gmra.mrb[0].mxu0 %v1641
        %v1694 = vpop.f32.mrb[0].mxu0
        %v1695 = vadd.f32 0.0, %v1694
        %v1696 = vpop.f32.mrb[0].mxu0
        %v1697 = vpop.f32.mrb[0].mxu0
        %v1698 = vadd.f32 0.0, %v1697
        %v1699 = vpop.f32.mrb[0].mxu0
        %1700 = vmatprep.mubr.bf16.mxu0 0
        %1701 = vmatmul.mubr.bf16.gmra.mrb[0].mxu0 %v1644
        %v1702 = vpop.f32.mrb[0].mxu0
        %v1703 = vadd.f32 0.0, %v1702
        %v1704 = vpop.f32.mrb[0].mxu0
        %v1705 = vpop.f32.mrb[0].mxu0
        %v1706 = vadd.f32 0.0, %v1705
        %v1707 = vpop.f32.mrb[0].mxu0
        %1708 = vmatprep.mubr.bf16.mxu0 0
        %1709 = vmatmul.mubr.bf16.gmra.mrb[0].mxu0 %v1647
        %v1710 = vpop.f32.mrb[0].mxu0
        %v1711 = vadd.f32 0.0, %v1710
        %v1712 = vpop.f32.mrb[0].mxu0
        %v1713 = vpop.f32.mrb[0].mxu0
        %v1714 = vadd.f32 0.0, %v1713
        %v1715 = vpop.f32.mrb[0].mxu0
        %1716 = vmatprep.mubr.bf16.mxu0 0
        %1717 = vmatmul.mubr.bf16.gmra.mrb[0].mxu0 %v1650
        %v1718 = vpop.f32.mrb[0].mxu0
        %v1719 = vadd.f32 0.0, %v1718
        %v1720 = vpop.f32.mrb[0].mxu0
        %v1721 = vpop.f32.mrb[0].mxu0
        %v1722 = vadd.f32 0.0, %v1721
        %v1723 = vpop.f32.mrb[0].mxu0
        %1724 = vdwg.mxu0
        %v1725 = vadd.f32 %v1578, %v1687
        %v1726 = vadd.f32 %v1579, %v1690
        %v1727 = vadd.f32 %v1580, %v1695
        %v1728 = vadd.f32 %v1581, %v1698
        %v1729 = vadd.f32 %v1582, %v1703
        %v1730 = vadd.f32 %v1583, %v1706
        %v1731 = vadd.f32 %v1584, %v1711
        %v1732 = vadd.f32 %v1585, %v1714
        %v1733 = vadd.f32 %v1586, %v1719
        %v1734 = vadd.f32 %v1587, %v1722
        %v1735 = vld [vmem:[%s2] sm:$0x1]
        %v1737 = vlaneseq
        %v1738 = vshrl.u32 %v1737, 7
        %v1739 = vsub.s32 0, %v1738
        %v1740 = vrot.slane %v1735, %v1739
        %v1742 = vadd.f32 %v1725, %v1740
        %v1743 = vadd.f32 %v1726, %v1740
        %v1744 = vadd.f32 %v1727, %v1740
        %v1745 = vadd.f32 %v1728, %v1740
        %v1746 = vadd.f32 %v1729, %v1740
        %v1747 = vadd.f32 %v1730, %v1740
        %v1748 = vadd.f32 %v1731, %v1740
        %v1749 = vadd.f32 %v1732, %v1740
        %v1750 = vadd.f32 %v1733, %v1740
        %v1751 = vadd.f32 %v1734, %v1740
        %v1752 = vmax.f32 %v1742, 0.0
        %v1753 = vmax.f32 %v1743, 0.0
        %v1754 = vmax.f32 %v1744, 0.0
        %v1755 = vmax.f32 %v1745, 0.0
        %v1756 = vmax.f32 %v1746, 0.0
        %v1757 = vmax.f32 %v1747, 0.0
        %v1758 = vmax.f32 %v1748, 0.0
        %v1759 = vmax.f32 %v1749, 0.0
        %v1760 = vmax.f32 %v1750, 0.0
        %v1761 = vmax.f32 %v1751, 0.0
        %v1762 = vld [vmem:[%s3 + $0xb] sm:$0xff]
        %v1763 = vld [vmem:[%s3 + $0x13] sm:$0xff]
        %v1764 = vld [vmem:[%s3 + $0x1b] sm:$0xff]
        %v1765 = vld [vmem:[%s3 + $0x23] sm:$0xff]
        %v1766 = vld [vmem:[%s3 + $0x2b] sm:$0xff]
        %v1767 = vld [vmem:[%s3 + $0x33] sm:$0xff]
        %v1768 = vld [vmem:[%s3 + $0x3b] sm:$0xff]
        %v1769 = vld [vmem:[%s3 + $0x43] sm:$0xff]
        %v1770 = vld [vmem:[%s3 + $0x4b] sm:$0xff]
        %v1771 = vld [vmem:[%s3 + $0x53] sm:$0x3f]
        %1773 = vset.pattern.permute.xlu0 0
        %1774 = vperm.xlu0 %1773, %v1762
        %v1775 = vpop.permute.xlu0 %1774
        %1778 = vset.pattern.permute.xlu0 0
        %1779 = vperm.xlu0 %1778, %v1763
        %v1780 = vpop.permute.xlu0 %1779
        %1783 = vset.pattern.permute.xlu0 0
        %1784 = vperm.xlu0 %1783, %v1764
        %v1785 = vpop.permute.xlu0 %1784
        %1788 = vset.pattern.permute.xlu0 0
        %1789 = vperm.xlu0 %1788, %v1765
        %v1790 = vpop.permute.xlu0 %1789
        %1793 = vset.pattern.permute.xlu0 0
        %1794 = vperm.xlu0 %1793, %v1766
        %v1795 = vpop.permute.xlu0 %1794
        %1798 = vset.pattern.permute.xlu0 0
        %1799 = vperm.xlu0 %1798, %v1767
        %v1800 = vpop.permute.xlu0 %1799
        %1803 = vset.pattern.permute.xlu0 0
        %1804 = vperm.xlu0 %1803, %v1768
        %v1805 = vpop.permute.xlu0 %1804
        %1808 = vset.pattern.permute.xlu0 0
        %1809 = vperm.xlu0 %1808, %v1769
        %v1810 = vpop.permute.xlu0 %1809
        %1813 = vset.pattern.permute.xlu0 0
        %1814 = vperm.xlu0 %1813, %v1770
        %v1815 = vpop.permute.xlu0 %1814
        %1818 = vset.pattern.permute.xlu0 0
        %1819 = vperm.xlu0 %1818, %v1771
        %v1820 = vpop.permute.xlu0 %1819
        %v1822 = vmul.f32 %v1752, %v1775
        %v1823 = vmul.f32 %v1753, %v1780
        %v1824 = vmul.f32 %v1754, %v1785
        %v1825 = vmul.f32 %v1755, %v1790
        %v1826 = vmul.f32 %v1756, %v1795
        %v1827 = vmul.f32 %v1757, %v1800
        %v1828 = vmul.f32 %v1758, %v1805
        %v1829 = vmul.f32 %v1759, %v1810
        %v1830 = vmul.f32 %v1760, %v1815
        %v1831 = vmul.f32 %v1761, %v1820
        %vm1832 = vcmask 519168
        %1833 = vst.msk [vmem:[%s212] sm:$0xf] %vm1832, 0
        %vm1834 = vcmask 517120
        %vm1835 = vsmask.f32 1280
        %vm1836 = vmand %vm1834, %vm1835
        %v1837 = vld [vmem:[%s212 + $0x4] sm:$0x3]
        %v1838 = vsel %vm1836, 0, %v1837
        %1839 = vst [vmem:[%s212 + $0x4] sm:$0x3] %v1838
        %vm1840 = vcmask 519168
        %vm1841 = vsmask.f32 7938
        %vm1842 = vmand %vm1840, %vm1841
        %v1843 = vld [vmem:[%s212 + $0x2c] sm:$0xf]
        %v1844 = vsel %vm1842, 0, %v1843
        %1845 = vst [vmem:[%s212 + $0x2c] sm:$0xf] %v1844
        %vm1846 = vcmask 517120
        %1847 = vst.msk [vmem:[%s212 + $0x30] sm:$0x3] %vm1846, 0
        %v1848 = vpack.c.bf16 %v1823, %v1822
        %v1849 = vpack.c.bf16 %v1825, %v1824
        %v1850 = vpack.c.bf16 %v1827, %v1826
        %v1851 = vpack.c.bf16 %v1829, %v1828
        %v1852 = vpack.c.bf16 %v1831, %v1830
        %v1858 = vunpack.c.l.b16 %v1848
        %v1859 = vunpack.c.h.b16 %v1848
        %v1860 = vunpack.c.l.b16 %v1849
        %v1861 = vunpack.c.h.b16 %v1849
        %v1862 = vunpack.c.l.b16 %v1850
        %v1863 = vunpack.c.h.b16 %v1850
        %v1864 = vunpack.c.l.b16 %v1851
        %v1865 = vunpack.c.h.b16 %v1851
        %v1866 = vunpack.c.l.b16 %v1852
        %v1867 = vunpack.c.h.b16 %v1852
        %v1868 = vpack.c.b16 %v1858, %v1858
        %v1869 = vpack.c.b16 %v1859, %v1859
        %v1870 = vpack.c.b16 %v1860, %v1860
        %v1871 = vpack.c.b16 %v1861, %v1861
        %v1872 = vpack.c.b16 %v1862, %v1862
        %v1873 = vpack.c.b16 %v1863, %v1863
        %v1874 = vpack.c.b16 %v1864, %v1864
        %v1875 = vpack.c.b16 %v1865, %v1865
        %v1876 = vpack.c.b16 %v1866, %v1866
        %v1877 = vpack.c.b16 %v1867, %v1867
        %vm1878 = vsmask.f32 5392
        %vm1879 = vmor %vm1835, %vm1878
        %v1881 = vshrl.u32 %v1868, 16
        %v1883 = vrot.slane %v1881, 6
        %v1884 = vshll.u32 %v1868, 16
        %v1886 = vrot.slane %v1884, 7
        %v1887 = vor.u32 %v1883, %v1886
        %v1888 = vrot.slane %v1887, 4
        %v1890 = vshrl.u32 %v1869, 16
        %v1892 = vrot.slane %v1890, 6
        %v1893 = vshll.u32 %v1869, 16
        %v1895 = vrot.slane %v1893, 7
        %v1896 = vor.u32 %v1892, %v1895
        %v1897 = vsel %vm1879, %v1888, %v1896
        %v1898 = vrot.slane %v1896, 4
        %v1900 = vshrl.u32 %v1870, 16
        %v1902 = vrot.slane %v1900, 6
        %v1903 = vshll.u32 %v1870, 16
        %v1905 = vrot.slane %v1903, 7
        %v1906 = vor.u32 %v1902, %v1905
        %v1907 = vsel %vm1879, %v1898, %v1906
        %v1908 = vrot.slane %v1906, 4
        %v1910 = vshrl.u32 %v1871, 16
        %v1912 = vrot.slane %v1910, 6
        %v1913 = vshll.u32 %v1871, 16
        %v1915 = vrot.slane %v1913, 7
        %v1916 = vor.u32 %v1912, %v1915
        %v1917 = vsel %vm1879, %v1908, %v1916
        %v1918 = vrot.slane %v1916, 4
        %v1920 = vshrl.u32 %v1872, 16
        %v1922 = vrot.slane %v1920, 6
        %v1923 = vshll.u32 %v1872, 16
        %v1925 = vrot.slane %v1923, 7
        %v1926 = vor.u32 %v1922, %v1925
        %v1927 = vsel %vm1879, %v1918, %v1926
        %v1928 = vrot.slane %v1926, 4
        %v1930 = vshrl.u32 %v1873, 16
        %v1932 = vrot.slane %v1930, 6
        %v1933 = vshll.u32 %v1873, 16
        %v1935 = vrot.slane %v1933, 7
        %v1936 = vor.u32 %v1932, %v1935
        %v1937 = vsel %vm1879, %v1928, %v1936
        %v1938 = vrot.slane %v1936, 4
        %v1940 = vshrl.u32 %v1874, 16
        %v1942 = vrot.slane %v1940, 6
        %v1943 = vshll.u32 %v1874, 16
        %v1945 = vrot.slane %v1943, 7
        %v1946 = vor.u32 %v1942, %v1945
        %v1947 = vsel %vm1879, %v1938, %v1946
        %v1948 = vrot.slane %v1946, 4
        %v1950 = vshrl.u32 %v1875, 16
        %v1952 = vrot.slane %v1950, 6
        %v1953 = vshll.u32 %v1875, 16
        %v1955 = vrot.slane %v1953, 7
        %v1956 = vor.u32 %v1952, %v1955
        %v1957 = vsel %vm1879, %v1948, %v1956
        %v1958 = vrot.slane %v1956, 4
        %v1960 = vshrl.u32 %v1876, 16
        %v1962 = vrot.slane %v1960, 6
        %v1963 = vshll.u32 %v1876, 16
        %v1965 = vrot.slane %v1963, 7
        %v1966 = vor.u32 %v1962, %v1965
        %v1967 = vsel %vm1879, %v1958, %v1966
        %v1968 = vrot.slane %v1966, 4
        %v1970 = vshrl.u32 %v1877, 16
        %v1972 = vrot.slane %v1970, 6
        %v1973 = vshll.u32 %v1877, 16
        %v1975 = vrot.slane %v1973, 7
        %v1976 = vor.u32 %v1972, %v1975
        %v1977 = vsel %vm1879, %v1968, %v1976
        %v1978 = vrot.slane %v1972, 4
        %vm1990 = vcmask 519169
        %vm1991 = vsmask.f32 7942
        %vm1992 = vmand %vm1990, %vm1991
        %v1993 = vld [vmem:[%s212 + $0x4] sm:$0xe]
        %v1994 = vsel %vm1992, %v1887, %v1993
        %1995 = vst [vmem:[%s212 + $0x4] sm:$0xe] %v1994
        %1996 = vst.msk [vmem:[%s212 + $0x8] sm:$0xf] %vm1832, %v1897
        %1997 = vst.msk [vmem:[%s212 + $0xc] sm:$0xf] %vm1832, %v1907
        %1998 = vst.msk [vmem:[%s212 + $0x10] sm:$0xf] %vm1832, %v1917
        %1999 = vst.msk [vmem:[%s212 + $0x14] sm:$0xf] %vm1832, %v1927
        %2000 = vst.msk [vmem:[%s212 + $0x18] sm:$0xf] %vm1832, %v1937
        %2001 = vst.msk [vmem:[%s212 + $0x1c] sm:$0xf] %vm1832, %v1947
        %2002 = vst.msk [vmem:[%s212 + $0x20] sm:$0xf] %vm1832, %v1957
        %2003 = vst.msk [vmem:[%s212 + $0x24] sm:$0xf] %vm1832, %v1967
        %2004 = vst.msk [vmem:[%s212 + $0x28] sm:$0xf] %vm1832, %v1977
        %vm2005 = vcmask 516096
        %vm2006 = vsmask.f32 256
        %vm2007 = vmand %vm2005, %vm2006
        %v2008 = vld [vmem:[%s212 + $0x2c] sm:$0x1]
        %v2009 = vsel %vm2007, %v1978, %v2008
        %2010 = vst [vmem:[%s212 + $0x2c] sm:$0x1] %v2009
        %p2011 = scmp.lt.s32.totalorder %s16, 1
        %s2012 = scalar_select %p2011, %s16, 1
        %s2013 = smul.addr %s2012, 13
        %s2014 = smul.addr %s2013, 4
        %s2015 = scalar_lea.vmem %s4, %s2014
        // Predicated region
        $region41: #{tpu_custom_call.1} parent=35 // pred_check
          %p2016 = pneg %p123
        $region42: #{tpu_custom_call.1} parent=35 // pred_check_branch
          %2018 = sbr.rel (%p2016) target = $region44
        $region43: #{tpu_custom_call.1} parent=35 // pred_region
          _
        $region44: #{tpu_custom_call.1} parent=35 // pred_fallthru
          _
      $region36: #{tpu_custom_call.1} parent=5 // pred_fallthru
        _
      %p2019 = scmp.le.s32.totalorder 2, %s11
      // Predicated region
      $region45: #{tpu_custom_call.1} parent=5 // pred_check
        %p2020 = pneg %p2019
      $region46: #{tpu_custom_call.1} parent=5 // pred_check_branch
        %2022 = sbr.rel (%p2020) target = $region48
      $region47: #{tpu_custom_call.1} parent=5 // pred_region
        %s2023 = ssub.s32 %s11, 2
        // Predicated region
        $region49: #{tpu_custom_call.1} parent=47 // pred_check
          %p2024 = pneg %p129
        $region50: #{tpu_custom_call.1} parent=47 // pred_check_branch
          %2026 = sbr.rel (%p2024) target = $region52
        $region51: #{tpu_custom_call.1} parent=47 // pred_region
          %p2027 = scmp.lt.s32.totalorder %s17, 1
          %s2028 = scalar_select %p2027, %s17, 1
          %s2029 = smul.addr %s2028, 13
          %s2030 = smul.addr %s2029, 4
          %s2031 = scalar_lea.vmem %s4, %s2030
        $region52: #{tpu_custom_call.1} parent=47 // pred_fallthru
          _
      $region48: #{tpu_custom_call.1} parent=5 // pred_fallthru
        _
    $region6: #{tpu_custom_call.1} parent=1 // loop_footer
      %s15 = sadd.s32 1, %s11
    $region7: #{tpu_custom_call.1} parent=1 // loop_footer_branch
      %10 = sbr.rel target = $region3
    $region8: #{tpu_custom_call.1} parent=1 // loop_exit
      _
    %2032 = vsyncpa [#allocation3], 1
    %s2033 = scalar_lea.sflag [#allocation3], 1
    %2034 = vsyncpa %s2033, 1

</llo_original>
